<compile_context>
chip_gen: v5e
topology: v5e:2x2
jax: 0.10.0
libtpu: 0.0.40
codegen_flags: <defaults>
</compile_context>

<pallas_src>
import math
import functools

import jax
import jax.numpy as jnp
from jax import lax
from jax.experimental import pallas as pl
from jax.experimental.pallas import tpu as pltpu


# ----------------------------- Pallas kernels ------------------------------

def _linear_kernel(x_ref, w_ref, b_ref, o_ref):
    # x: (tm, Din), w: (Din, Dout) resident, b: (1, Dout)  -> o: (tm, Dout)
    o_ref[...] = (
        jnp.dot(x_ref[...], w_ref[...], preferred_element_type=jnp.float32)
        + b_ref[...]
    ).astype(o_ref.dtype)


def _attention_out_kernel(qkv_ref, wo_ref, bo_ref, o_ref, att_ref,
                          *, n_heads, d_k, scale):
    # One batch element per grid step; all heads handled here.
    D = n_heads * d_k
    qkv = qkv_ref[0]                       # (S, 3D) fused q|k|v projections
    q = qkv[:, 0 * D:1 * D]                # (S, D)
    k = qkv[:, 1 * D:2 * D]
    v = qkv[:, 2 * D:3 * D]
    S = q.shape[0]

    acc = jnp.zeros((S, D), dtype=jnp.float32)
    for j in range(n_heads):               # static unroll over heads
        lo, hi = j * d_k, (j + 1) * d_k
        qj = q[:, lo:hi]                   # (S, d_k)
        kj = k[:, lo:hi]
        vj = v[:, lo:hi]
        # scores = qj @ kj^T without materializing the transpose.
        s = lax.dot_general(
            qj, kj, dimension_numbers=(((1,), (1,)), ((), ())),
            preferred_element_type=jnp.float32) * scale            # (S, S)
        m = jnp.max(s, axis=-1, keepdims=True)
        e = jnp.exp(s - m)
        # reciprocal-of-rowsum + multiply instead of a full-tile divide
        # (approx=True would push it onto the EUP at ~1e-3 accuracy).
        p = e * pl.reciprocal(jnp.sum(e, axis=-1, keepdims=True))
        att_ref[0, j] = p.astype(att_ref.dtype)
        ctx = jnp.dot(p, vj, preferred_element_type=jnp.float32)   # (S, d_k)
        # Fold the output projection in per head (sublane-aligned wo slice).
        acc = acc + jnp.dot(ctx, wo_ref[lo:hi, :],
                            preferred_element_type=jnp.float32)
    o_ref[0] = (acc + bo_ref[...]).astype(o_ref.dtype)


# ------------------------------ wrappers ------------------------------------

def linear(x, w, b, *, tm_max=512):
    """Tiled y = x @ w + b.  x: (M, Din); w: (Din, Dout); b: (Dout,).

    Grid over M ('parallel'); weight stays resident, x/out double-buffered.
    tm_max=512 keeps the working set ~10 MiB with a (512, 1536) f32 weight,
    inside the 32 MiB default-scoped VMEM (and v7x's 64 MiB physical).
    """
    M, Din = x.shape
    Dout = w.shape[1]
    tm = min(M, tm_max)        # tm == M (<= tm_max) or a multiple of 8
    return pl.pallas_call(
        _linear_kernel,
        grid=(pl.cdiv(M, tm),),
        out_shape=jax.ShapeDtypeStruct((M, Dout), x.dtype),
        in_specs=[
            pl.BlockSpec((tm, Din), lambda i: (i, 0)),
            pl.BlockSpec((Din, Dout), lambda i: (0, 0)),   # weight resident
            pl.BlockSpec((1, Dout), lambda i: (0, 0)),
        ],
        out_specs=pl.BlockSpec((tm, Dout), lambda i: (i, 0)),
        compiler_params=pltpu.CompilerParams(
            dimension_semantics=("parallel",),
            vmem_limit_bytes=32 * 1024 * 1024,
        ),
    )(x, w, b.reshape(1, Dout))


def multi_head_attention(x_q, x_k, x_v, params, h):
    B, S, D = x_q.shape
    d_k = D // h
    (wq, bq), (wk, bk), (wv, bv), (wo, bo) = params

    if x_k is x_q and x_v is x_q:
        # Self-attention: fuse Q/K/V into one wide matmul (1 launch, x read once).
        w_qkv = jnp.concatenate([wq, wk, wv], axis=1)      # (D, 3D)
        b_qkv = jnp.concatenate([bq, bk, bv], axis=0)      # (3D,)
        qkv = linear(x_q.reshape(B * S, D), w_qkv, b_qkv)  # (B*S, 3D)
    else:
        qkv = jnp.concatenate(
            [linear(x_q.reshape(B * S, D), wq, bq),
             linear(x_k.reshape(B * S, D), wk, bk),
             linear(x_v.reshape(B * S, D), wv, bv)], axis=-1)
    qkv = qkv.reshape(B, S, 3 * D)          # free reshape, no transpose

    kernel = functools.partial(_attention_out_kernel, n_heads=h, d_k=d_k,
                               scale=1.0 / math.sqrt(d_k))
    out, att = pl.pallas_call(
        kernel,
        grid=(B,),
        out_shape=(
            jax.ShapeDtypeStruct((B, S, D), x_q.dtype),
            jax.ShapeDtypeStruct((B, h, S, S), jnp.float32),
        ),
        in_specs=[
            pl.BlockSpec((1, S, 3 * D), lambda b: (b, 0, 0)),
            pl.BlockSpec((D, D), lambda b: (0, 0)),        # Wo resident
            pl.BlockSpec((1, D), lambda b: (0, 0)),
        ],
        out_specs=(
            pl.BlockSpec((1, S, D), lambda b: (b, 0, 0)),       # lane-dense write
            pl.BlockSpec((1, h, S, S), lambda b: (b, 0, 0, 0)),
        ),
        compiler_params=pltpu.CompilerParams(
            # batch axis 'parallel' -> feeds both v7x TensorCores when B >= 2
            dimension_semantics=("parallel",),
        ),
    )(qkv, wo, bo.reshape(1, D))
    return out, att


# ------------------------- params + reference -------------------------------

def init_params(key, d_model):
    """4 Linear(d_model, d_model) layers, PyTorch-style uniform init."""
    bound = 1.0 / math.sqrt(d_model)
    params = []
    keys = jax.random.split(key, 8)
    for i in range(4):
        w = jax.random.uniform(keys[2 * i], (d_model, d_model),
                               minval=-bound, maxval=bound, dtype=jnp.float32)
        b = jax.random.uniform(keys[2 * i + 1], (d_model,),
                               minval=-bound, maxval=bound, dtype=jnp.float32)
        params.append((w.T, b))  # store transposed: (d_in, d_out)
    return params


def reference_mha(x_q, x_k, x_v, params, h):
    B, S, D = x_q.shape
    d_k = D // h
    (wq, bq), (wk, bk), (wv, bv), (wo, bo) = params

    def lin(x, w, b):
        return x @ w + b

    def heads(t):
        return t.reshape(B, S, h, d_k).transpose(0, 2, 1, 3)

    q, k, v = heads(lin(x_q, wq, bq)), heads(lin(x_k, wk, bk)), heads(lin(x_v, wv, bv))
    scores = jnp.einsum("bhqd,bhkd->bhqk", q, k) / math.sqrt(d_k)
    p = jax.nn.softmax(scores, axis=-1)
    ctx = jnp.einsum("bhqk,bhkd->bhqd", p, v)
    ctx = ctx.transpose(0, 2, 1, 3).reshape(B, S, D)
    return lin(ctx, wo, bo), p


# --------------------------------- main --------------------------------------

if __name__ == "__main__":
    batch_size, seq_length, d_model, h = 1, 10, 512, 8

    root = jax.random.PRNGKey(0)
    k_x, k_p = jax.random.split(root)
    x = jax.random.normal(k_x, (batch_size, seq_length, d_model), dtype=jnp.float32)
    params = init_params(k_p, d_model)

    # In the PyTorch snippet query == key == value.
    out, att = multi_head_attention(x, x, x, params, h)
    out = jax.block_until_ready(out)
    att = jax.block_until_ready(att)

    ref_out, ref_att = reference_mha(x, x, x, params, h)
    assert out.shape == (batch_size, seq_length, d_model)
    assert att.shape == (batch_size, h, seq_length, seq_length)
    assert jnp.allclose(out, ref_out, atol=1e-4, rtol=1e-4)
    assert jnp.allclose(att, ref_att, atol=1e-5, rtol=1e-5)

    print("KERNEL_OK")
</pallas_src>

<mosaic_0001>
module attributes {stable_mosaic.version = 11 : i64} {
  func.func @_linear_kernel(%arg0: i32, %arg1: memref<10x512xf32, #tpu.memory_space<vmem>>, %arg2: memref<512x1536xf32, #tpu.memory_space<vmem>>, %arg3: memref<1x1536xf32, #tpu.memory_space<vmem>>, %arg4: memref<10x1536xf32, #tpu.memory_space<vmem>>) attributes {dimension_semantics = [#tpu.dimension_semantics<parallel>], iteration_bounds = array<i64: 1>, scalar_prefetch = 0 : i64, scratch_operands = 0 : i64, tpu.core_type = #tpu.core_type<tc>, window_params = [{transform_indices = @transform_0, window_bounds = array<i64: 10, 512>}, {pipeline_mode = #tpu.pipeline_mode<synchronous>, transform_indices = @transform_1, window_bounds = array<i64: 512, 1536>}, {pipeline_mode = #tpu.pipeline_mode<synchronous>, transform_indices = @transform_2, window_bounds = array<i64: 1, 1536>}, {transform_indices = @transform_3, window_bounds = array<i64: 10, 1536>}]} {
    %c0 = arith.constant 0 : index
    %c0_0 = arith.constant 0 : index
    %0 = vector.load %arg1[%c0, %c0_0] : memref<10x512xf32, #tpu.memory_space<vmem>>, vector<10x512xf32>
    %c0_1 = arith.constant 0 : index
    %c0_2 = arith.constant 0 : index
    %1 = vector.load %arg2[%c0_1, %c0_2] : memref<512x1536xf32, #tpu.memory_space<vmem>>, vector<512x1536xf32>
    %cst = arith.constant dense<0.000000e+00> : vector<10x1536xf32>
    %2 = tpu.matmul %0, %1, %cst {dimension_numbers = #tpu.dot_dimension_numbers<[1], [0], [0], [1], [0, 0, 1, 1], [], []>} : vector<10x512xf32>, vector<512x1536xf32>, vector<10x1536xf32> -> vector<10x1536xf32>
    %c0_3 = arith.constant 0 : index
    %c0_4 = arith.constant 0 : index
    %3 = vector.load %arg3[%c0_3, %c0_4] : memref<1x1536xf32, #tpu.memory_space<vmem>>, vector<1x1536xf32>
    %4 = vector.broadcast %3 : vector<1x1536xf32> to vector<10x1536xf32>
    %5 = arith.addf %2, %4 : vector<10x1536xf32>
    %c0_5 = arith.constant 0 : index
    %c0_6 = arith.constant 0 : index
    %6 = vector.load %arg4[%c0_5, %c0_6] : memref<10x1536xf32, #tpu.memory_space<vmem>>, vector<10x1536xf32>
    tpu.vector_store %arg4[%c0_5, %c0_6], %5 {strides = array<i32>} : memref<10x1536xf32, #tpu.memory_space<vmem>>, vector<10x1536xf32>,
    return
  }
  func.func @transform_0(%arg0: i32) -> (i32, i32) {
    %c0_i32 = arith.constant 0 : i32
    %c0_i32_0 = arith.constant 0 : i32
    return %arg0, %c0_i32 : i32, i32
  }
  func.func @transform_1(%arg0: i32) -> (i32, i32) {
    %c0_i32 = arith.constant 0 : i32
    %c0_i32_0 = arith.constant 0 : i32
    %c0_i32_1 = arith.constant 0 : i32
    return %c0_i32, %c0_i32_0 : i32, i32
  }
  func.func @transform_2(%arg0: i32) -> (i32, i32) {
    %c0_i32 = arith.constant 0 : i32
    %c0_i32_0 = arith.constant 0 : i32
    %c0_i32_1 = arith.constant 0 : i32
    return %c0_i32, %c0_i32_0 : i32, i32
  }
  func.func @transform_3(%arg0: i32) -> (i32, i32) {
    %c0_i32 = arith.constant 0 : i32
    %c0_i32_0 = arith.constant 0 : i32
    return %arg0, %c0_i32 : i32, i32
  }
}

</mosaic_0001>

<llo_original>
// kernel: tpu_custom_call.1
$region0: #{tpu_custom_call.1}
  #allocation0 [shape = 'u32[]', space=smem, size = 0x4, offset = 0x4, fixed_abs, tag = 'smem constant byte address 0x4 - core index']
  #allocation1 [shape = 'u32[72,128]{1,0:T(1,128)}', space=vmem, size = 0x9000, scoped, tag = 'internal scratch']
  %s0 = inlined_call_operand.hbm [shape: f32[10,512], index: 0, kind: input, shape index: {}]
  %s1 = inlined_call_operand.hbm [shape: f32[512,1536], index: 1, kind: input, shape index: {}]
  %s2 = inlined_call_operand.hbm [shape: f32[1,1536], index: 2, kind: input, shape index: {}]
  %s3 = inlined_call_operand.hbm [shape: f32[10,1536], index: 3, kind: output, shape index: {}]
  %s4 = sld [smem:[#allocation0]]
  $region34: #{tpu_custom_call.1} parent=0
    _
  %s6 = ssub.s32 1, %s4
  %s7 = scalar_select 0, %s6, %s4
  $region1: #{tpu_custom_call.1} parent=0
    #allocation2 [shape = 'u8[32768]{0}', space=vmem, size = 0x8000, scoped, tag = 'input window, operand 0, single buffered']
    #allocation3 [shape = 's32[1]{0}', space=sflag, size = 0x4, scoped, tag = 'scoped memory for tpu_custom_call.1']
    #allocation4 [shape = 's32[1]{0}', space=sflag, size = 0x4, scoped, tag = 'scoped memory for tpu_custom_call.1']
    #allocation5 [shape = 'u8[3145728]{0}', space=vmem, size = 0x300000, scoped, tag = 'input window, operand 1, single buffered']
    #allocation6 [shape = 's32[1]{0}', space=sflag, size = 0x4, scoped, tag = 'scoped memory for tpu_custom_call.1']
    #allocation7 [shape = 'u8[6144]{0}', space=vmem, size = 0x1800, scoped, tag = 'input window, operand 2, single buffered']
    #allocation8 [shape = 'u8[98304]{0}', space=vmem, size = 0x18000, scoped, tag = 'output window, operand 0, single buffered']
    %8 = vsyncpa [#allocation3], 0
    %9 = vsyncpa [#allocation6], 0
    %10 = vsyncpa [#allocation4], 0
    // Predicated region
    $region2: #{tpu_custom_call.1} parent=1 // pred_check
      _
    $region3: #{tpu_custom_call.1} parent=1 // pred_check_branch
      %12 = sbr.rel (0) target = $region5
    $region4: #{tpu_custom_call.1} parent=1 // pred_region
      %14 = vsyncadd [#allocation3], 0
      %s15 = sshll.u32 %s0, 4
      %s16 = int_to_ptr.hbm [resolvable:$true] %s15
      %s17 = sshll.u32 [#allocation2], 4
      %s18 = int_to_ptr.vmem [resolvable:$true] %s17
      %23 = dma.hbm_to_vmem [thread:$0]  %s16, 1024, %s18, [#allocation3], 512, 512, 32
    $region5: #{tpu_custom_call.1} parent=1 // pred_fallthru
      _
    // Predicated region
    $region6: #{tpu_custom_call.1} parent=1 // pred_check
      _
    $region7: #{tpu_custom_call.1} parent=1 // pred_check_branch
      %25 = sbr.rel (0) target = $region9
    $region8: #{tpu_custom_call.1} parent=1 // pred_region
      %27 = vsyncadd [#allocation6], 0
      %s28 = sshll.u32 %s1, 4
      %s29 = int_to_ptr.hbm [resolvable:$true] %s28
      %s30 = sshll.u32 [#allocation5], 4
      %s31 = int_to_ptr.vmem [resolvable:$true] %s30
      %36 = dma.hbm_to_vmem [thread:$0]  %s29, 98304, %s31, [#allocation6], 1536, 1536, 96
    $region9: #{tpu_custom_call.1} parent=1 // pred_fallthru
      _
    // Predicated region
    $region10: #{tpu_custom_call.1} parent=1 // pred_check
      _
    $region11: #{tpu_custom_call.1} parent=1 // pred_check_branch
      %38 = sbr.rel (0) target = $region13
    $region12: #{tpu_custom_call.1} parent=1 // pred_region
      %40 = vsyncadd [#allocation6], 0
      %s42 = sshll.u32 %s2, 4
      %s43 = int_to_ptr.hbm [resolvable:$true] %s42
      %s44 = sshll.u32 [#allocation7], 4
      %s45 = int_to_ptr.vmem [resolvable:$true] %s44
      %47 = dma.hbm_to_vmem [thread:$0]  %s43, 192, %s45, [#allocation6]
    $region13: #{tpu_custom_call.1} parent=1 // pred_fallthru
      _
    // Predicated region
    $region14: #{tpu_custom_call.1} parent=1 // pred_check
      _
    $region15: #{tpu_custom_call.1} parent=1 // pred_check_branch
      %49 = sbr.rel (0) target = $region17
    $region16: #{tpu_custom_call.1} parent=1 // pred_region
      %51 = dma.done [#allocation3], 1024
    $region17: #{tpu_custom_call.1} parent=1 // pred_fallthru
      _
    // Predicated region
    $region18: #{tpu_custom_call.1} parent=1 // pred_check
      _
    $region19: #{tpu_custom_call.1} parent=1 // pred_check_branch
      %53 = sbr.rel (0) target = $region21
    $region20: #{tpu_custom_call.1} parent=1 // pred_region
      %55 = dma.done [#allocation6], 98304
    $region21: #{tpu_custom_call.1} parent=1 // pred_fallthru
      _
    // Predicated region
    $region22: #{tpu_custom_call.1} parent=1 // pred_check
      _
    $region23: #{tpu_custom_call.1} parent=1 // pred_check_branch
      %57 = sbr.rel (0) target = $region25
    $region24: #{tpu_custom_call.1} parent=1 // pred_region
      %59 = dma.done [#allocation6], 192
    $region25: #{tpu_custom_call.1} parent=1 // pred_fallthru
      _
    %v60 = vld [vmem:[#allocation2] sm:$0xff]
    %v61 = vld [vmem:[#allocation2 + $0x8] sm:$0xff]
    %v62 = vld [vmem:[#allocation2 + $0x10] sm:$0xff]
    %v63 = vld [vmem:[#allocation2 + $0x18] sm:$0xff]
    %v64 = vld [vmem:[#allocation2 + $0x20] sm:$0x3]
    %v65 = vld [vmem:[#allocation2 + $0x28] sm:$0x3]
    %v66 = vld [vmem:[#allocation2 + $0x30] sm:$0x3]
    %v67 = vld [vmem:[#allocation2 + $0x38] sm:$0x3]
    %v68 = vld [vmem:[#allocation5] sm:$0xff]
    %v69 = vld [vmem:[#allocation5 + $0x8] sm:$0xff]
    %v70 = vld [vmem:[#allocation5 + $0x10] sm:$0xff]
    %v71 = vld [vmem:[#allocation5 + $0x18] sm:$0xff]
    %v72 = vld [vmem:[#allocation5 + $0x20] sm:$0xff]
    %v73 = vld [vmem:[#allocation5 + $0x28] sm:$0xff]
    %v74 = vld [vmem:[#allocation5 + $0x30] sm:$0xff]
    %v75 = vld [vmem:[#allocation5 + $0x38] sm:$0xff]
    %v76 = vld [vmem:[#allocation5 + $0x40] sm:$0xff]
    %v77 = vld [vmem:[#allocation5 + $0x48] sm:$0xff]
    %v78 = vld [vmem:[#allocation5 + $0x50] sm:$0xff]
    %v79 = vld [vmem:[#allocation5 + $0x58] sm:$0xff]
    %v80 = vld [vmem:[#allocation5 + $0x60] sm:$0xff]
    %v81 = vld [vmem:[#allocation5 + $0x68] sm:$0xff]
    %v82 = vld [vmem:[#allocation5 + $0x70] sm:$0xff]
    %v83 = vld [vmem:[#allocation5 + $0x78] sm:$0xff]
    %v84 = vld [vmem:[#allocation5 + $0x80] sm:$0xff]
    %v85 = vld [vmem:[#allocation5 + $0x88] sm:$0xff]
    %v86 = vld [vmem:[#allocation5 + $0x90] sm:$0xff]
    %v87 = vld [vmem:[#allocation5 + $0x98] sm:$0xff]
    %v88 = vld [vmem:[#allocation5 + $0xa0] sm:$0xff]
    %v89 = vld [vmem:[#allocation5 + $0xa8] sm:$0xff]
    %v90 = vld [vmem:[#allocation5 + $0xb0] sm:$0xff]
    %v91 = vld [vmem:[#allocation5 + $0xb8] sm:$0xff]
    %v92 = vld [vmem:[#allocation5 + $0xc0] sm:$0xff]
    %v93 = vld [vmem:[#allocation5 + $0xc8] sm:$0xff]
    %v94 = vld [vmem:[#allocation5 + $0xd0] sm:$0xff]
    %v95 = vld [vmem:[#allocation5 + $0xd8] sm:$0xff]
    %v96 = vld [vmem:[#allocation5 + $0xe0] sm:$0xff]
    %v97 = vld [vmem:[#allocation5 + $0xe8] sm:$0xff]
    %v98 = vld [vmem:[#allocation5 + $0xf0] sm:$0xff]
    %v99 = vld [vmem:[#allocation5 + $0xf8] sm:$0xff]
    %v100 = vld [vmem:[#allocation5 + $0x100] sm:$0xff]
    %v101 = vld [vmem:[#allocation5 + $0x108] sm:$0xff]
    %v102 = vld [vmem:[#allocation5 + $0x110] sm:$0xff]
    %v103 = vld [vmem:[#allocation5 + $0x118] sm:$0xff]
    %v104 = vld [vmem:[#allocation5 + $0x120] sm:$0xff]
    %v105 = vld [vmem:[#allocation5 + $0x128] sm:$0xff]
    %v106 = vld [vmem:[#allocation5 + $0x130] sm:$0xff]
    %v107 = vld [vmem:[#allocation5 + $0x138] sm:$0xff]
    %v108 = vld [vmem:[#allocation5 + $0x140] sm:$0xff]
    %v109 = vld [vmem:[#allocation5 + $0x148] sm:$0xff]
    %v110 = vld [vmem:[#allocation5 + $0x150] sm:$0xff]
    %v111 = vld [vmem:[#allocation5 + $0x158] sm:$0xff]
    %v112 = vld [vmem:[#allocation5 + $0x160] sm:$0xff]
    %v113 = vld [vmem:[#allocation5 + $0x168] sm:$0xff]
    %v114 = vld [vmem:[#allocation5 + $0x170] sm:$0xff]
    %v115 = vld [vmem:[#allocation5 + $0x178] sm:$0xff]
    %v116 = vld [vmem:[#allocation5 + $0x180] sm:$0xff]
    %v117 = vld [vmem:[#allocation5 + $0x188] sm:$0xff]
    %v118 = vld [vmem:[#allocation5 + $0x190] sm:$0xff]
    %v119 = vld [vmem:[#allocation5 + $0x198] sm:$0xff]
    %v120 = vld [vmem:[#allocation5 + $0x1a0] sm:$0xff]
    %v121 = vld [vmem:[#allocation5 + $0x1a8] sm:$0xff]
    %v122 = vld [vmem:[#allocation5 + $0x1b0] sm:$0xff]
    %v123 = vld [vmem:[#allocation5 + $0x1b8] sm:$0xff]
    %v124 = vld [vmem:[#allocation5 + $0x1c0] sm:$0xff]
    %v125 = vld [vmem:[#allocation5 + $0x1c8] sm:$0xff]
    %v126 = vld [vmem:[#allocation5 + $0x1d0] sm:$0xff]
    %v127 = vld [vmem:[#allocation5 + $0x1d8] sm:$0xff]
    %v128 = vld [vmem:[#allocation5 + $0x1e0] sm:$0xff]
    %v129 = vld [vmem:[#allocation5 + $0x1e8] sm:$0xff]
    %v130 = vld [vmem:[#allocation5 + $0x1f0] sm:$0xff]
    %v131 = vld [vmem:[#allocation5 + $0x1f8] sm:$0xff]
    %v132 = vld [vmem:[#allocation5 + $0x200] sm:$0xff]
    %v133 = vld [vmem:[#allocation5 + $0x208] sm:$0xff]
    %v134 = vld [vmem:[#allocation5 + $0x210] sm:$0xff]
    %v135 = vld [vmem:[#allocation5 + $0x218] sm:$0xff]
    %v136 = vld [vmem:[#allocation5 + $0x220] sm:$0xff]
    %v137 = vld [vmem:[#allocation5 + $0x228] sm:$0xff]
    %v138 = vld [vmem:[#allocation5 + $0x230] sm:$0xff]
    %v139 = vld [vmem:[#allocation5 + $0x238] sm:$0xff]
    %v140 = vld [vmem:[#allocation5 + $0x240] sm:$0xff]
    %v141 = vld [vmem:[#allocation5 + $0x248] sm:$0xff]
    %v142 = vld [vmem:[#allocation5 + $0x250] sm:$0xff]
    %v143 = vld [vmem:[#allocation5 + $0x258] sm:$0xff]
    %v144 = vld [vmem:[#allocation5 + $0x260] sm:$0xff]
    %v145 = vld [vmem:[#allocation5 + $0x268] sm:$0xff]
    %v146 = vld [vmem:[#allocation5 + $0x270] sm:$0xff]
    %v147 = vld [vmem:[#allocation5 + $0x278] sm:$0xff]
    %v148 = vld [vmem:[#allocation5 + $0x280] sm:$0xff]
    %v149 = vld [vmem:[#allocation5 + $0x288] sm:$0xff]
    %v150 = vld [vmem:[#allocation5 + $0x290] sm:$0xff]
    %v151 = vld [vmem:[#allocation5 + $0x298] sm:$0xff]
    %v152 = vld [vmem:[#allocation5 + $0x2a0] sm:$0xff]
    %v153 = vld [vmem:[#allocation5 + $0x2a8] sm:$0xff]
    %v154 = vld [vmem:[#allocation5 + $0x2b0] sm:$0xff]
    %v155 = vld [vmem:[#allocation5 + $0x2b8] sm:$0xff]
    %v156 = vld [vmem:[#allocation5 + $0x2c0] sm:$0xff]
    %v157 = vld [vmem:[#allocation5 + $0x2c8] sm:$0xff]
    %v158 = vld [vmem:[#allocation5 + $0x2d0] sm:$0xff]
    %v159 = vld [vmem:[#allocation5 + $0x2d8] sm:$0xff]
    %v160 = vld [vmem:[#allocation5 + $0x2e0] sm:$0xff]
    %v161 = vld [vmem:[#allocation5 + $0x2e8] sm:$0xff]
    %v162 = vld [vmem:[#allocation5 + $0x2f0] sm:$0xff]
    %v163 = vld [vmem:[#allocation5 + $0x2f8] sm:$0xff]
    %v164 = vld [vmem:[#allocation5 + $0x300] sm:$0xff]
    %v165 = vld [vmem:[#allocation5 + $0x308] sm:$0xff]
    %v166 = vld [vmem:[#allocation5 + $0x310] sm:$0xff]
    %v167 = vld [vmem:[#allocation5 + $0x318] sm:$0xff]
    %v168 = vld [vmem:[#allocation5 + $0x320] sm:$0xff]
    %v169 = vld [vmem:[#allocation5 + $0x328] sm:$0xff]
    %v170 = vld [vmem:[#allocation5 + $0x330] sm:$0xff]
    %v171 = vld [vmem:[#allocation5 + $0x338] sm:$0xff]
    %v172 = vld [vmem:[#allocation5 + $0x340] sm:$0xff]
    %v173 = vld [vmem:[#allocation5 + $0x348] sm:$0xff]
    %v174 = vld [vmem:[#allocation5 + $0x350] sm:$0xff]
    %v175 = vld [vmem:[#allocation5 + $0x358] sm:$0xff]
    %v176 = vld [vmem:[#allocation5 + $0x360] sm:$0xff]
    %v177 = vld [vmem:[#allocation5 + $0x368] sm:$0xff]
    %v178 = vld [vmem:[#allocation5 + $0x370] sm:$0xff]
    %v179 = vld [vmem:[#allocation5 + $0x378] sm:$0xff]
    %v180 = vld [vmem:[#allocation5 + $0x380] sm:$0xff]
    %v181 = vld [vmem:[#allocation5 + $0x388] sm:$0xff]
    %v182 = vld [vmem:[#allocation5 + $0x390] sm:$0xff]
    %v183 = vld [vmem:[#allocation5 + $0x398] sm:$0xff]
    %v184 = vld [vmem:[#allocation5 + $0x3a0] sm:$0xff]
    %v185 = vld [vmem:[#allocation5 + $0x3a8] sm:$0xff]
    %v186 = vld [vmem:[#allocation5 + $0x3b0] sm:$0xff]
    %v187 = vld [vmem:[#allocation5 + $0x3b8] sm:$0xff]
    %v188 = vld [vmem:[#allocation5 + $0x3c0] sm:$0xff]
    %v189 = vld [vmem:[#allocation5 + $0x3c8] sm:$0xff]
    %v190 = vld [vmem:[#allocation5 + $0x3d0] sm:$0xff]
    %v191 = vld [vmem:[#allocation5 + $0x3d8] sm:$0xff]
    %v192 = vld [vmem:[#allocation5 + $0x3e0] sm:$0xff]
    %v193 = vld [vmem:[#allocation5 + $0x3e8] sm:$0xff]
    %v194 = vld [vmem:[#allocation5 + $0x3f0] sm:$0xff]
    %v195 = vld [vmem:[#allocation5 + $0x3f8] sm:$0xff]
    %v196 = vld [vmem:[#allocation5 + $0x400] sm:$0xff]
    %v197 = vld [vmem:[#allocation5 + $0x408] sm:$0xff]
    %v198 = vld [vmem:[#allocation5 + $0x410] sm:$0xff]
    %v199 = vld [vmem:[#allocation5 + $0x418] sm:$0xff]
    %v200 = vld [vmem:[#allocation5 + $0x420] sm:$0xff]
    %v201 = vld [vmem:[#allocation5 + $0x428] sm:$0xff]
    %v202 = vld [vmem:[#allocation5 + $0x430] sm:$0xff]
    %v203 = vld [vmem:[#allocation5 + $0x438] sm:$0xff]
    %v204 = vld [vmem:[#allocation5 + $0x440] sm:$0xff]
    %v205 = vld [vmem:[#allocation5 + $0x448] sm:$0xff]
    %v206 = vld [vmem:[#allocation5 + $0x450] sm:$0xff]
    %v207 = vld [vmem:[#allocation5 + $0x458] sm:$0xff]
    %v208 = vld [vmem:[#allocation5 + $0x460] sm:$0xff]
    %v209 = vld [vmem:[#allocation5 + $0x468] sm:$0xff]
    %v210 = vld [vmem:[#allocation5 + $0x470] sm:$0xff]
    %v211 = vld [vmem:[#allocation5 + $0x478] sm:$0xff]
    %v212 = vld [vmem:[#allocation5 + $0x480] sm:$0xff]
    %v213 = vld [vmem:[#allocation5 + $0x488] sm:$0xff]
    %v214 = vld [vmem:[#allocation5 + $0x490] sm:$0xff]
    %v215 = vld [vmem:[#allocation5 + $0x498] sm:$0xff]
    %v216 = vld [vmem:[#allocation5 + $0x4a0] sm:$0xff]
    %v217 = vld [vmem:[#allocation5 + $0x4a8] sm:$0xff]
    %v218 = vld [vmem:[#allocation5 + $0x4b0] sm:$0xff]
    %v219 = vld [vmem:[#allocation5 + $0x4b8] sm:$0xff]
    %v220 = vld [vmem:[#allocation5 + $0x4c0] sm:$0xff]
    %v221 = vld [vmem:[#allocation5 + $0x4c8] sm:$0xff]
    %v222 = vld [vmem:[#allocation5 + $0x4d0] sm:$0xff]
    %v223 = vld [vmem:[#allocation5 + $0x4d8] sm:$0xff]
    %v224 = vld [vmem:[#allocation5 + $0x4e0] sm:$0xff]
    %v225 = vld [vmem:[#allocation5 + $0x4e8] sm:$0xff]
    %v226 = vld [vmem:[#allocation5 + $0x4f0] sm:$0xff]
    %v227 = vld [vmem:[#allocation5 + $0x4f8] sm:$0xff]
    %v228 = vld [vmem:[#allocation5 + $0x500] sm:$0xff]
    %v229 = vld [vmem:[#allocation5 + $0x508] sm:$0xff]
    %v230 = vld [vmem:[#allocation5 + $0x510] sm:$0xff]
    %v231 = vld [vmem:[#allocation5 + $0x518] sm:$0xff]
    %v232 = vld [vmem:[#allocation5 + $0x520] sm:$0xff]
    %v233 = vld [vmem:[#allocation5 + $0x528] sm:$0xff]
    %v234 = vld [vmem:[#allocation5 + $0x530] sm:$0xff]
    %v235 = vld [vmem:[#allocation5 + $0x538] sm:$0xff]
    %v236 = vld [vmem:[#allocation5 + $0x540] sm:$0xff]
    %v237 = vld [vmem:[#allocation5 + $0x548] sm:$0xff]
    %v238 = vld [vmem:[#allocation5 + $0x550] sm:$0xff]
    %v239 = vld [vmem:[#allocation5 + $0x558] sm:$0xff]
    %v240 = vld [vmem:[#allocation5 + $0x560] sm:$0xff]
    %v241 = vld [vmem:[#allocation5 + $0x568] sm:$0xff]
    %v242 = vld [vmem:[#allocation5 + $0x570] sm:$0xff]
    %v243 = vld [vmem:[#allocation5 + $0x578] sm:$0xff]
    %v244 = vld [vmem:[#allocation5 + $0x580] sm:$0xff]
    %v245 = vld [vmem:[#allocation5 + $0x588] sm:$0xff]
    %v246 = vld [vmem:[#allocation5 + $0x590] sm:$0xff]
    %v247 = vld [vmem:[#allocation5 + $0x598] sm:$0xff]
    %v248 = vld [vmem:[#allocation5 + $0x5a0] sm:$0xff]
    %v249 = vld [vmem:[#allocation5 + $0x5a8] sm:$0xff]
    %v250 = vld [vmem:[#allocation5 + $0x5b0] sm:$0xff]
    %v251 = vld [vmem:[#allocation5 + $0x5b8] sm:$0xff]
    %v252 = vld [vmem:[#allocation5 + $0x5c0] sm:$0xff]
    %v253 = vld [vmem:[#allocation5 + $0x5c8] sm:$0xff]
    %v254 = vld [vmem:[#allocation5 + $0x5d0] sm:$0xff]
    %v255 = vld [vmem:[#allocation5 + $0x5d8] sm:$0xff]
    %v256 = vld [vmem:[#allocation5 + $0x5e0] sm:$0xff]
    %v257 = vld [vmem:[#allocation5 + $0x5e8] sm:$0xff]
    %v258 = vld [vmem:[#allocation5 + $0x5f0] sm:$0xff]
    %v259 = vld [vmem:[#allocation5 + $0x5f8] sm:$0xff]
    %v260 = vld [vmem:[#allocation5 + $0x600] sm:$0xff]
    %v261 = vld [vmem:[#allocation5 + $0x608] sm:$0xff]
    %v262 = vld [vmem:[#allocation5 + $0x610] sm:$0xff]
    %v263 = vld [vmem:[#allocation5 + $0x618] sm:$0xff]
    %v264 = vld [vmem:[#allocation5 + $0x620] sm:$0xff]
    %v265 = vld [vmem:[#allocation5 + $0x628] sm:$0xff]
    %v266 = vld [vmem:[#allocation5 + $0x630] sm:$0xff]
    %v267 = vld [vmem:[#allocation5 + $0x638] sm:$0xff]
    %v268 = vld [vmem:[#allocation5 + $0x640] sm:$0xff]
    %v269 = vld [vmem:[#allocation5 + $0x648] sm:$0xff]
    %v270 = vld [vmem:[#allocation5 + $0x650] sm:$0xff]
    %v271 = vld [vmem:[#allocation5 + $0x658] sm:$0xff]
    %v272 = vld [vmem:[#allocation5 + $0x660] sm:$0xff]
    %v273 = vld [vmem:[#allocation5 + $0x668] sm:$0xff]
    %v274 = vld [vmem:[#allocation5 + $0x670] sm:$0xff]
    %v275 = vld [vmem:[#allocation5 + $0x678] sm:$0xff]
    %v276 = vld [vmem:[#allocation5 + $0x680] sm:$0xff]
    %v277 = vld [vmem:[#allocation5 + $0x688] sm:$0xff]
    %v278 = vld [vmem:[#allocation5 + $0x690] sm:$0xff]
    %v279 = vld [vmem:[#allocation5 + $0x698] sm:$0xff]
    %v280 = vld [vmem:[#allocation5 + $0x6a0] sm:$0xff]
    %v281 = vld [vmem:[#allocation5 + $0x6a8] sm:$0xff]
    %v282 = vld [vmem:[#allocation5 + $0x6b0] sm:$0xff]
    %v283 = vld [vmem:[#allocation5 + $0x6b8] sm:$0xff]
    %v284 = vld [vmem:[#allocation5 + $0x6c0] sm:$0xff]
    %v285 = vld [vmem:[#allocation5 + $0x6c8] sm:$0xff]
    %v286 = vld [vmem:[#allocation5 + $0x6d0] sm:$0xff]
    %v287 = vld [vmem:[#allocation5 + $0x6d8] sm:$0xff]
    %v288 = vld [vmem:[#allocation5 + $0x6e0] sm:$0xff]
    %v289 = vld [vmem:[#allocation5 + $0x6e8] sm:$0xff]
    %v290 = vld [vmem:[#allocation5 + $0x6f0] sm:$0xff]
    %v291 = vld [vmem:[#allocation5 + $0x6f8] sm:$0xff]
    %v292 = vld [vmem:[#allocation5 + $0x700] sm:$0xff]
    %v293 = vld [vmem:[#allocation5 + $0x708] sm:$0xff]
    %v294 = vld [vmem:[#allocation5 + $0x710] sm:$0xff]
    %v295 = vld [vmem:[#allocation5 + $0x718] sm:$0xff]
    %v296 = vld [vmem:[#allocation5 + $0x720] sm:$0xff]
    %v297 = vld [vmem:[#allocation5 + $0x728] sm:$0xff]
    %v298 = vld [vmem:[#allocation5 + $0x730] sm:$0xff]
    %v299 = vld [vmem:[#allocation5 + $0x738] sm:$0xff]
    %v300 = vld [vmem:[#allocation5 + $0x740] sm:$0xff]
    %v301 = vld [vmem:[#allocation5 + $0x748] sm:$0xff]
    %v302 = vld [vmem:[#allocation5 + $0x750] sm:$0xff]
    %v303 = vld [vmem:[#allocation5 + $0x758] sm:$0xff]
    %v304 = vld [vmem:[#allocation5 + $0x760] sm:$0xff]
    %v305 = vld [vmem:[#allocation5 + $0x768] sm:$0xff]
    %v306 = vld [vmem:[#allocation5 + $0x770] sm:$0xff]
    %v307 = vld [vmem:[#allocation5 + $0x778] sm:$0xff]
    %v308 = vld [vmem:[#allocation5 + $0x780] sm:$0xff]
    %v309 = vld [vmem:[#allocation5 + $0x788] sm:$0xff]
    %v310 = vld [vmem:[#allocation5 + $0x790] sm:$0xff]
    %v311 = vld [vmem:[#allocation5 + $0x798] sm:$0xff]
    %v312 = vld [vmem:[#allocation5 + $0x7a0] sm:$0xff]
    %v313 = vld [vmem:[#allocation5 + $0x7a8] sm:$0xff]
    %v314 = vld [vmem:[#allocation5 + $0x7b0] sm:$0xff]
    %v315 = vld [vmem:[#allocation5 + $0x7b8] sm:$0xff]
    %v316 = vld [vmem:[#allocation5 + $0x7c0] sm:$0xff]
    %v317 = vld [vmem:[#allocation5 + $0x7c8] sm:$0xff]
    %v318 = vld [vmem:[#allocation5 + $0x7d0] sm:$0xff]
    %v319 = vld [vmem:[#allocation5 + $0x7d8] sm:$0xff]
    %v320 = vld [vmem:[#allocation5 + $0x7e0] sm:$0xff]
    %v321 = vld [vmem:[#allocation5 + $0x7e8] sm:$0xff]
    %v322 = vld [vmem:[#allocation5 + $0x7f0] sm:$0xff]
    %v323 = vld [vmem:[#allocation5 + $0x7f8] sm:$0xff]
    %v324 = vld [vmem:[#allocation5 + $0x800] sm:$0xff]
    %v325 = vld [vmem:[#allocation5 + $0x808] sm:$0xff]
    %v326 = vld [vmem:[#allocation5 + $0x810] sm:$0xff]
    %v327 = vld [vmem:[#allocation5 + $0x818] sm:$0xff]
    %v328 = vld [vmem:[#allocation5 + $0x820] sm:$0xff]
    %v329 = vld [vmem:[#allocation5 + $0x828] sm:$0xff]
    %v330 = vld [vmem:[#allocation5 + $0x830] sm:$0xff]
    %v331 = vld [vmem:[#allocation5 + $0x838] sm:$0xff]
    %v332 = vld [vmem:[#allocation5 + $0x840] sm:$0xff]
    %v333 = vld [vmem:[#allocation5 + $0x848] sm:$0xff]
    %v334 = vld [vmem:[#allocation5 + $0x850] sm:$0xff]
    %v335 = vld [vmem:[#allocation5 + $0x858] sm:$0xff]
    %v336 = vld [vmem:[#allocation5 + $0x860] sm:$0xff]
    %v337 = vld [vmem:[#allocation5 + $0x868] sm:$0xff]
    %v338 = vld [vmem:[#allocation5 + $0x870] sm:$0xff]
    %v339 = vld [vmem:[#allocation5 + $0x878] sm:$0xff]
    %v340 = vld [vmem:[#allocation5 + $0x880] sm:$0xff]
    %v341 = vld [vmem:[#allocation5 + $0x888] sm:$0xff]
    %v342 = vld [vmem:[#allocation5 + $0x890] sm:$0xff]
    %v343 = vld [vmem:[#allocation5 + $0x898] sm:$0xff]
    %v344 = vld [vmem:[#allocation5 + $0x8a0] sm:$0xff]
    %v345 = vld [vmem:[#allocation5 + $0x8a8] sm:$0xff]
    %v346 = vld [vmem:[#allocation5 + $0x8b0] sm:$0xff]
    %v347 = vld [vmem:[#allocation5 + $0x8b8] sm:$0xff]
    %v348 = vld [vmem:[#allocation5 + $0x8c0] sm:$0xff]
    %v349 = vld [vmem:[#allocation5 + $0x8c8] sm:$0xff]
    %v350 = vld [vmem:[#allocation5 + $0x8d0] sm:$0xff]
    %v351 = vld [vmem:[#allocation5 + $0x8d8] sm:$0xff]
    %v352 = vld [vmem:[#allocation5 + $0x8e0] sm:$0xff]
    %v353 = vld [vmem:[#allocation5 + $0x8e8] sm:$0xff]
    %v354 = vld [vmem:[#allocation5 + $0x8f0] sm:$0xff]
    %v355 = vld [vmem:[#allocation5 + $0x8f8] sm:$0xff]
    %v356 = vld [vmem:[#allocation5 + $0x900] sm:$0xff]
    %v357 = vld [vmem:[#allocation5 + $0x908] sm:$0xff]
    %v358 = vld [vmem:[#allocation5 + $0x910] sm:$0xff]
    %v359 = vld [vmem:[#allocation5 + $0x918] sm:$0xff]
    %v360 = vld [vmem:[#allocation5 + $0x920] sm:$0xff]
    %v361 = vld [vmem:[#allocation5 + $0x928] sm:$0xff]
    %v362 = vld [vmem:[#allocation5 + $0x930] sm:$0xff]
    %v363 = vld [vmem:[#allocation5 + $0x938] sm:$0xff]
    %v364 = vld [vmem:[#allocation5 + $0x940] sm:$0xff]
    %v365 = vld [vmem:[#allocation5 + $0x948] sm:$0xff]
    %v366 = vld [vmem:[#allocation5 + $0x950] sm:$0xff]
    %v367 = vld [vmem:[#allocation5 + $0x958] sm:$0xff]
    %v368 = vld [vmem:[#allocation5 + $0x960] sm:$0xff]
    %v369 = vld [vmem:[#allocation5 + $0x968] sm:$0xff]
    %v370 = vld [vmem:[#allocation5 + $0x970] sm:$0xff]
    %v371 = vld [vmem:[#allocation5 + $0x978] sm:$0xff]
    %v372 = vld [vmem:[#allocation5 + $0x980] sm:$0xff]
    %v373 = vld [vmem:[#allocation5 + $0x988] sm:$0xff]
    %v374 = vld [vmem:[#allocation5 + $0x990] sm:$0xff]
    %v375 = vld [vmem:[#allocation5 + $0x998] sm:$0xff]
    %v376 = vld [vmem:[#allocation5 + $0x9a0] sm:$0xff]
    %v377 = vld [vmem:[#allocation5 + $0x9a8] sm:$0xff]
    %v378 = vld [vmem:[#allocation5 + $0x9b0] sm:$0xff]
    %v379 = vld [vmem:[#allocation5 + $0x9b8] sm:$0xff]
    %v380 = vld [vmem:[#allocation5 + $0x9c0] sm:$0xff]
    %v381 = vld [vmem:[#allocation5 + $0x9c8] sm:$0xff]
    %v382 = vld [vmem:[#allocation5 + $0x9d0] sm:$0xff]
    %v383 = vld [vmem:[#allocation5 + $0x9d8] sm:$0xff]
    %v384 = vld [vmem:[#allocation5 + $0x9e0] sm:$0xff]
    %v385 = vld [vmem:[#allocation5 + $0x9e8] sm:$0xff]
    %v386 = vld [vmem:[#allocation5 + $0x9f0] sm:$0xff]
    %v387 = vld [vmem:[#allocation5 + $0x9f8] sm:$0xff]
    %v388 = vld [vmem:[#allocation5 + $0xa00] sm:$0xff]
    %v389 = vld [vmem:[#allocation5 + $0xa08] sm:$0xff]
    %v390 = vld [vmem:[#allocation5 + $0xa10] sm:$0xff]
    %v391 = vld [vmem:[#allocation5 + $0xa18] sm:$0xff]
    %v392 = vld [vmem:[#allocation5 + $0xa20] sm:$0xff]
    %v393 = vld [vmem:[#allocation5 + $0xa28] sm:$0xff]
    %v394 = vld [vmem:[#allocation5 + $0xa30] sm:$0xff]
    %v395 = vld [vmem:[#allocation5 + $0xa38] sm:$0xff]
    %v396 = vld [vmem:[#allocation5 + $0xa40] sm:$0xff]
    %v397 = vld [vmem:[#allocation5 + $0xa48] sm:$0xff]
    %v398 = vld [vmem:[#allocation5 + $0xa50] sm:$0xff]
    %v399 = vld [vmem:[#allocation5 + $0xa58] sm:$0xff]
    %v400 = vld [vmem:[#allocation5 + $0xa60] sm:$0xff]
    %v401 = vld [vmem:[#allocation5 + $0xa68] sm:$0xff]
    %v402 = vld [vmem:[#allocation5 + $0xa70] sm:$0xff]
    %v403 = vld [vmem:[#allocation5 + $0xa78] sm:$0xff]
    %v404 = vld [vmem:[#allocation5 + $0xa80] sm:$0xff]
    %v405 = vld [vmem:[#allocation5 + $0xa88] sm:$0xff]
    %v406 = vld [vmem:[#allocation5 + $0xa90] sm:$0xff]
    %v407 = vld [vmem:[#allocation5 + $0xa98] sm:$0xff]
    %v408 = vld [vmem:[#allocation5 + $0xaa0] sm:$0xff]
    %v409 = vld [vmem:[#allocation5 + $0xaa8] sm:$0xff]
    %v410 = vld [vmem:[#allocation5 + $0xab0] sm:$0xff]
    %v411 = vld [vmem:[#allocation5 + $0xab8] sm:$0xff]
    %v412 = vld [vmem:[#allocation5 + $0xac0] sm:$0xff]
    %v413 = vld [vmem:[#allocation5 + $0xac8] sm:$0xff]
    %v414 = vld [vmem:[#allocation5 + $0xad0] sm:$0xff]
    %v415 = vld [vmem:[#allocation5 + $0xad8] sm:$0xff]
    %v416 = vld [vmem:[#allocation5 + $0xae0] sm:$0xff]
    %v417 = vld [vmem:[#allocation5 + $0xae8] sm:$0xff]
    %v418 = vld [vmem:[#allocation5 + $0xaf0] sm:$0xff]
    %v419 = vld [vmem:[#allocation5 + $0xaf8] sm:$0xff]
    %v420 = vld [vmem:[#allocation5 + $0xb00] sm:$0xff]
    %v421 = vld [vmem:[#allocation5 + $0xb08] sm:$0xff]
    %v422 = vld [vmem:[#allocation5 + $0xb10] sm:$0xff]
    %v423 = vld [vmem:[#allocation5 + $0xb18] sm:$0xff]
    %v424 = vld [vmem:[#allocation5 + $0xb20] sm:$0xff]
    %v425 = vld [vmem:[#allocation5 + $0xb28] sm:$0xff]
    %v426 = vld [vmem:[#allocation5 + $0xb30] sm:$0xff]
    %v427 = vld [vmem:[#allocation5 + $0xb38] sm:$0xff]
    %v428 = vld [vmem:[#allocation5 + $0xb40] sm:$0xff]
    %v429 = vld [vmem:[#allocation5 + $0xb48] sm:$0xff]
    %v430 = vld [vmem:[#allocation5 + $0xb50] sm:$0xff]
    %v431 = vld [vmem:[#allocation5 + $0xb58] sm:$0xff]
    %v432 = vld [vmem:[#allocation5 + $0xb60] sm:$0xff]
    %v433 = vld [vmem:[#allocation5 + $0xb68] sm:$0xff]
    %v434 = vld [vmem:[#allocation5 + $0xb70] sm:$0xff]
    %v435 = vld [vmem:[#allocation5 + $0xb78] sm:$0xff]
    %v436 = vld [vmem:[#allocation5 + $0xb80] sm:$0xff]
    %v437 = vld [vmem:[#allocation5 + $0xb88] sm:$0xff]
    %v438 = vld [vmem:[#allocation5 + $0xb90] sm:$0xff]
    %v439 = vld [vmem:[#allocation5 + $0xb98] sm:$0xff]
    %v440 = vld [vmem:[#allocation5 + $0xba0] sm:$0xff]
    %v441 = vld [vmem:[#allocation5 + $0xba8] sm:$0xff]
    %v442 = vld [vmem:[#allocation5 + $0xbb0] sm:$0xff]
    %v443 = vld [vmem:[#allocation5 + $0xbb8] sm:$0xff]
    %v444 = vld [vmem:[#allocation5 + $0xbc0] sm:$0xff]
    %v445 = vld [vmem:[#allocation5 + $0xbc8] sm:$0xff]
    %v446 = vld [vmem:[#allocation5 + $0xbd0] sm:$0xff]
    %v447 = vld [vmem:[#allocation5 + $0xbd8] sm:$0xff]
    %v448 = vld [vmem:[#allocation5 + $0xbe0] sm:$0xff]
    %v449 = vld [vmem:[#allocation5 + $0xbe8] sm:$0xff]
    %v450 = vld [vmem:[#allocation5 + $0xbf0] sm:$0xff]
    %v451 = vld [vmem:[#allocation5 + $0xbf8] sm:$0xff]
    %v452 = vld [vmem:[#allocation5 + $0xc00] sm:$0xff]
    %v453 = vld [vmem:[#allocation5 + $0xc08] sm:$0xff]
    %v454 = vld [vmem:[#allocation5 + $0xc10] sm:$0xff]
    %v455 = vld [vmem:[#allocation5 + $0xc18] sm:$0xff]
    %v456 = vld [vmem:[#allocation5 + $0xc20] sm:$0xff]
    %v457 = vld [vmem:[#allocation5 + $0xc28] sm:$0xff]
    %v458 = vld [vmem:[#allocation5 + $0xc30] sm:$0xff]
    %v459 = vld [vmem:[#allocation5 + $0xc38] sm:$0xff]
    %v460 = vld [vmem:[#allocation5 + $0xc40] sm:$0xff]
    %v461 = vld [vmem:[#allocation5 + $0xc48] sm:$0xff]
    %v462 = vld [vmem:[#allocation5 + $0xc50] sm:$0xff]
    %v463 = vld [vmem:[#allocation5 + $0xc58] sm:$0xff]
    %v464 = vld [vmem:[#allocation5 + $0xc60] sm:$0xff]
    %v465 = vld [vmem:[#allocation5 + $0xc68] sm:$0xff]
    %v466 = vld [vmem:[#allocation5 + $0xc70] sm:$0xff]
    %v467 = vld [vmem:[#allocation5 + $0xc78] sm:$0xff]
    %v468 = vld [vmem:[#allocation5 + $0xc80] sm:$0xff]
    %v469 = vld [vmem:[#allocation5 + $0xc88] sm:$0xff]
    %v470 = vld [vmem:[#allocation5 + $0xc90] sm:$0xff]
    %v471 = vld [vmem:[#allocation5 + $0xc98] sm:$0xff]
    %v472 = vld [vmem:[#allocation5 + $0xca0] sm:$0xff]
    %v473 = vld [vmem:[#allocation5 + $0xca8] sm:$0xff]
    %v474 = vld [vmem:[#allocation5 + $0xcb0] sm:$0xff]
    %v475 = vld [vmem:[#allocation5 + $0xcb8] sm:$0xff]
    %v476 = vld [vmem:[#allocation5 + $0xcc0] sm:$0xff]
    %v477 = vld [vmem:[#allocation5 + $0xcc8] sm:$0xff]
    %v478 = vld [vmem:[#allocation5 + $0xcd0] sm:$0xff]
    %v479 = vld [vmem:[#allocation5 + $0xcd8] sm:$0xff]
    %v480 = vld [vmem:[#allocation5 + $0xce0] sm:$0xff]
    %v481 = vld [vmem:[#allocation5 + $0xce8] sm:$0xff]
    %v482 = vld [vmem:[#allocation5 + $0xcf0] sm:$0xff]
    %v483 = vld [vmem:[#allocation5 + $0xcf8] sm:$0xff]
    %v484 = vld [vmem:[#allocation5 + $0xd00] sm:$0xff]
    %v485 = vld [vmem:[#allocation5 + $0xd08] sm:$0xff]
    %v486 = vld [vmem:[#allocation5 + $0xd10] sm:$0xff]
    %v487 = vld [vmem:[#allocation5 + $0xd18] sm:$0xff]
    %v488 = vld [vmem:[#allocation5 + $0xd20] sm:$0xff]
    %v489 = vld [vmem:[#allocation5 + $0xd28] sm:$0xff]
    %v490 = vld [vmem:[#allocation5 + $0xd30] sm:$0xff]
    %v491 = vld [vmem:[#allocation5 + $0xd38] sm:$0xff]
    %v492 = vld [vmem:[#allocation5 + $0xd40] sm:$0xff]
    %v493 = vld [vmem:[#allocation5 + $0xd48] sm:$0xff]
    %v494 = vld [vmem:[#allocation5 + $0xd50] sm:$0xff]
    %v495 = vld [vmem:[#allocation5 + $0xd58] sm:$0xff]
    %v496 = vld [vmem:[#allocation5 + $0xd60] sm:$0xff]
    %v497 = vld [vmem:[#allocation5 + $0xd68] sm:$0xff]
    %v498 = vld [vmem:[#allocation5 + $0xd70] sm:$0xff]
    %v499 = vld [vmem:[#allocation5 + $0xd78] sm:$0xff]
    %v500 = vld [vmem:[#allocation5 + $0xd80] sm:$0xff]
    %v501 = vld [vmem:[#allocation5 + $0xd88] sm:$0xff]
    %v502 = vld [vmem:[#allocation5 + $0xd90] sm:$0xff]
    %v503 = vld [vmem:[#allocation5 + $0xd98] sm:$0xff]
    %v504 = vld [vmem:[#allocation5 + $0xda0] sm:$0xff]
    %v505 = vld [vmem:[#allocation5 + $0xda8] sm:$0xff]
    %v506 = vld [vmem:[#allocation5 + $0xdb0] sm:$0xff]
    %v507 = vld [vmem:[#allocation5 + $0xdb8] sm:$0xff]
    %v508 = vld [vmem:[#allocation5 + $0xdc0] sm:$0xff]
    %v509 = vld [vmem:[#allocation5 + $0xdc8] sm:$0xff]
    %v510 = vld [vmem:[#allocation5 + $0xdd0] sm:$0xff]
    %v511 = vld [vmem:[#allocation5 + $0xdd8] sm:$0xff]
    %v512 = vld [vmem:[#allocation5 + $0xde0] sm:$0xff]
    %v513 = vld [vmem:[#allocation5 + $0xde8] sm:$0xff]
    %v514 = vld [vmem:[#allocation5 + $0xdf0] sm:$0xff]
    %v515 = vld [vmem:[#allocation5 + $0xdf8] sm:$0xff]
    %v516 = vld [vmem:[#allocation5 + $0xe00] sm:$0xff]
    %v517 = vld [vmem:[#allocation5 + $0xe08] sm:$0xff]
    %v518 = vld [vmem:[#allocation5 + $0xe10] sm:$0xff]
    %v519 = vld [vmem:[#allocation5 + $0xe18] sm:$0xff]
    %v520 = vld [vmem:[#allocation5 + $0xe20] sm:$0xff]
    %v521 = vld [vmem:[#allocation5 + $0xe28] sm:$0xff]
    %v522 = vld [vmem:[#allocation5 + $0xe30] sm:$0xff]
    %v523 = vld [vmem:[#allocation5 + $0xe38] sm:$0xff]
    %v524 = vld [vmem:[#allocation5 + $0xe40] sm:$0xff]
    %v525 = vld [vmem:[#allocation5 + $0xe48] sm:$0xff]
    %v526 = vld [vmem:[#allocation5 + $0xe50] sm:$0xff]
    %v527 = vld [vmem:[#allocation5 + $0xe58] sm:$0xff]
    %v528 = vld [vmem:[#allocation5 + $0xe60] sm:$0xff]
    %v529 = vld [vmem:[#allocation5 + $0xe68] sm:$0xff]
    %v530 = vld [vmem:[#allocation5 + $0xe70] sm:$0xff]
    %v531 = vld [vmem:[#allocation5 + $0xe78] sm:$0xff]
    %v532 = vld [vmem:[#allocation5 + $0xe80] sm:$0xff]
    %v533 = vld [vmem:[#allocation5 + $0xe88] sm:$0xff]
    %v534 = vld [vmem:[#allocation5 + $0xe90] sm:$0xff]
    %v535 = vld [vmem:[#allocation5 + $0xe98] sm:$0xff]
    %v536 = vld [vmem:[#allocation5 + $0xea0] sm:$0xff]
    %v537 = vld [vmem:[#allocation5 + $0xea8] sm:$0xff]
    %v538 = vld [vmem:[#allocation5 + $0xeb0] sm:$0xff]
    %v539 = vld [vmem:[#allocation5 + $0xeb8] sm:$0xff]
    %v540 = vld [vmem:[#allocation5 + $0xec0] sm:$0xff]
    %v541 = vld [vmem:[#allocation5 + $0xec8] sm:$0xff]
    %v542 = vld [vmem:[#allocation5 + $0xed0] sm:$0xff]
    %v543 = vld [vmem:[#allocation5 + $0xed8] sm:$0xff]
    %v544 = vld [vmem:[#allocation5 + $0xee0] sm:$0xff]
    %v545 = vld [vmem:[#allocation5 + $0xee8] sm:$0xff]
    %v546 = vld [vmem:[#allocation5 + $0xef0] sm:$0xff]
    %v547 = vld [vmem:[#allocation5 + $0xef8] sm:$0xff]
    %v548 = vld [vmem:[#allocation5 + $0xf00] sm:$0xff]
    %v549 = vld [vmem:[#allocation5 + $0xf08] sm:$0xff]
    %v550 = vld [vmem:[#allocation5 + $0xf10] sm:$0xff]
    %v551 = vld [vmem:[#allocation5 + $0xf18] sm:$0xff]
    %v552 = vld [vmem:[#allocation5 + $0xf20] sm:$0xff]
    %v553 = vld [vmem:[#allocation5 + $0xf28] sm:$0xff]
    %v554 = vld [vmem:[#allocation5 + $0xf30] sm:$0xff]
    %v555 = vld [vmem:[#allocation5 + $0xf38] sm:$0xff]
    %v556 = vld [vmem:[#allocation5 + $0xf40] sm:$0xff]
    %v557 = vld [vmem:[#allocation5 + $0xf48] sm:$0xff]
    %v558 = vld [vmem:[#allocation5 + $0xf50] sm:$0xff]
    %v559 = vld [vmem:[#allocation5 + $0xf58] sm:$0xff]
    %v560 = vld [vmem:[#allocation5 + $0xf60] sm:$0xff]
    %v561 = vld [vmem:[#allocation5 + $0xf68] sm:$0xff]
    %v562 = vld [vmem:[#allocation5 + $0xf70] sm:$0xff]
    %v563 = vld [vmem:[#allocation5 + $0xf78] sm:$0xff]
    %v564 = vld [vmem:[#allocation5 + $0xf80] sm:$0xff]
    %v565 = vld [vmem:[#allocation5 + $0xf88] sm:$0xff]
    %v566 = vld [vmem:[#allocation5 + $0xf90] sm:$0xff]
    %v567 = vld [vmem:[#allocation5 + $0xf98] sm:$0xff]
    %v568 = vld [vmem:[#allocation5 + $0xfa0] sm:$0xff]
    %v569 = vld [vmem:[#allocation5 + $0xfa8] sm:$0xff]
    %v570 = vld [vmem:[#allocation5 + $0xfb0] sm:$0xff]
    %v571 = vld [vmem:[#allocation5 + $0xfb8] sm:$0xff]
    %v572 = vld [vmem:[#allocation5 + $0xfc0] sm:$0xff]
    %v573 = vld [vmem:[#allocation5 + $0xfc8] sm:$0xff]
    %v574 = vld [vmem:[#allocation5 + $0xfd0] sm:$0xff]
    %v575 = vld [vmem:[#allocation5 + $0xfd8] sm:$0xff]
    %v576 = vld [vmem:[#allocation5 + $0xfe0] sm:$0xff]
    %v577 = vld [vmem:[#allocation5 + $0xfe8] sm:$0xff]
    %v578 = vld [vmem:[#allocation5 + $0xff0] sm:$0xff]
    %v579 = vld [vmem:[#allocation5 + $0xff8] sm:$0xff]
    %v580 = vld [vmem:[#allocation5 + $0x1000] sm:$0xff]
    %v581 = vld [vmem:[#allocation5 + $0x1008] sm:$0xff]
    %v582 = vld [vmem:[#allocation5 + $0x1010] sm:$0xff]
    %v583 = vld [vmem:[#allocation5 + $0x1018] sm:$0xff]
    %v584 = vld [vmem:[#allocation5 + $0x1020] sm:$0xff]
    %v585 = vld [vmem:[#allocation5 + $0x1028] sm:$0xff]
    %v586 = vld [vmem:[#allocation5 + $0x1030] sm:$0xff]
    %v587 = vld [vmem:[#allocation5 + $0x1038] sm:$0xff]
    %v588 = vld [vmem:[#allocation5 + $0x1040] sm:$0xff]
    %v589 = vld [vmem:[#allocation5 + $0x1048] sm:$0xff]
    %v590 = vld [vmem:[#allocation5 + $0x1050] sm:$0xff]
    %v591 = vld [vmem:[#allocation5 + $0x1058] sm:$0xff]
    %v592 = vld [vmem:[#allocation5 + $0x1060] sm:$0xff]
    %v593 = vld [vmem:[#allocation5 + $0x1068] sm:$0xff]
    %v594 = vld [vmem:[#allocation5 + $0x1070] sm:$0xff]
    %v595 = vld [vmem:[#allocation5 + $0x1078] sm:$0xff]
    %v596 = vld [vmem:[#allocation5 + $0x1080] sm:$0xff]
    %v597 = vld [vmem:[#allocation5 + $0x1088] sm:$0xff]
    %v598 = vld [vmem:[#allocation5 + $0x1090] sm:$0xff]
    %v599 = vld [vmem:[#allocation5 + $0x1098] sm:$0xff]
    %v600 = vld [vmem:[#allocation5 + $0x10a0] sm:$0xff]
    %v601 = vld [vmem:[#allocation5 + $0x10a8] sm:$0xff]
    %v602 = vld [vmem:[#allocation5 + $0x10b0] sm:$0xff]
    %v603 = vld [vmem:[#allocation5 + $0x10b8] sm:$0xff]
    %v604 = vld [vmem:[#allocation5 + $0x10c0] sm:$0xff]
    %v605 = vld [vmem:[#allocation5 + $0x10c8] sm:$0xff]
    %v606 = vld [vmem:[#allocation5 + $0x10d0] sm:$0xff]
    %v607 = vld [vmem:[#allocation5 + $0x10d8] sm:$0xff]
    %v608 = vld [vmem:[#allocation5 + $0x10e0] sm:$0xff]
    %v609 = vld [vmem:[#allocation5 + $0x10e8] sm:$0xff]
    %v610 = vld [vmem:[#allocation5 + $0x10f0] sm:$0xff]
    %v611 = vld [vmem:[#allocation5 + $0x10f8] sm:$0xff]
    %v612 = vld [vmem:[#allocation5 + $0x1100] sm:$0xff]
    %v613 = vld [vmem:[#allocation5 + $0x1108] sm:$0xff]
    %v614 = vld [vmem:[#allocation5 + $0x1110] sm:$0xff]
    %v615 = vld [vmem:[#allocation5 + $0x1118] sm:$0xff]
    %v616 = vld [vmem:[#allocation5 + $0x1120] sm:$0xff]
    %v617 = vld [vmem:[#allocation5 + $0x1128] sm:$0xff]
    %v618 = vld [vmem:[#allocation5 + $0x1130] sm:$0xff]
    %v619 = vld [vmem:[#allocation5 + $0x1138] sm:$0xff]
    %v620 = vld [vmem:[#allocation5 + $0x1140] sm:$0xff]
    %v621 = vld [vmem:[#allocation5 + $0x1148] sm:$0xff]
    %v622 = vld [vmem:[#allocation5 + $0x1150] sm:$0xff]
    %v623 = vld [vmem:[#allocation5 + $0x1158] sm:$0xff]
    %v624 = vld [vmem:[#allocation5 + $0x1160] sm:$0xff]
    %v625 = vld [vmem:[#allocation5 + $0x1168] sm:$0xff]
    %v626 = vld [vmem:[#allocation5 + $0x1170] sm:$0xff]
    %v627 = vld [vmem:[#allocation5 + $0x1178] sm:$0xff]
    %v628 = vld [vmem:[#allocation5 + $0x1180] sm:$0xff]
    %v629 = vld [vmem:[#allocation5 + $0x1188] sm:$0xff]
    %v630 = vld [vmem:[#allocation5 + $0x1190] sm:$0xff]
    %v631 = vld [vmem:[#allocation5 + $0x1198] sm:$0xff]
    %v632 = vld [vmem:[#allocation5 + $0x11a0] sm:$0xff]
    %v633 = vld [vmem:[#allocation5 + $0x11a8] sm:$0xff]
    %v634 = vld [vmem:[#allocation5 + $0x11b0] sm:$0xff]
    %v635 = vld [vmem:[#allocation5 + $0x11b8] sm:$0xff]
    %v636 = vld [vmem:[#allocation5 + $0x11c0] sm:$0xff]
    %v637 = vld [vmem:[#allocation5 + $0x11c8] sm:$0xff]
    %v638 = vld [vmem:[#allocation5 + $0x11d0] sm:$0xff]
    %v639 = vld [vmem:[#allocation5 + $0x11d8] sm:$0xff]
    %v640 = vld [vmem:[#allocation5 + $0x11e0] sm:$0xff]
    %v641 = vld [vmem:[#allocation5 + $0x11e8] sm:$0xff]
    %v642 = vld [vmem:[#allocation5 + $0x11f0] sm:$0xff]
    %v643 = vld [vmem:[#allocation5 + $0x11f8] sm:$0xff]
    %v644 = vld [vmem:[#allocation5 + $0x1200] sm:$0xff]
    %v645 = vld [vmem:[#allocation5 + $0x1208] sm:$0xff]
    %v646 = vld [vmem:[#allocation5 + $0x1210] sm:$0xff]
    %v647 = vld [vmem:[#allocation5 + $0x1218] sm:$0xff]
    %v648 = vld [vmem:[#allocation5 + $0x1220] sm:$0xff]
    %v649 = vld [vmem:[#allocation5 + $0x1228] sm:$0xff]
    %v650 = vld [vmem:[#allocation5 + $0x1230] sm:$0xff]
    %v651 = vld [vmem:[#allocation5 + $0x1238] sm:$0xff]
    %v652 = vld [vmem:[#allocation5 + $0x1240] sm:$0xff]
    %v653 = vld [vmem:[#allocation5 + $0x1248] sm:$0xff]
    %v654 = vld [vmem:[#allocation5 + $0x1250] sm:$0xff]
    %v655 = vld [vmem:[#allocation5 + $0x1258] sm:$0xff]
    %v656 = vld [vmem:[#allocation5 + $0x1260] sm:$0xff]
    %v657 = vld [vmem:[#allocation5 + $0x1268] sm:$0xff]
    %v658 = vld [vmem:[#allocation5 + $0x1270] sm:$0xff]
    %v659 = vld [vmem:[#allocation5 + $0x1278] sm:$0xff]
    %v660 = vld [vmem:[#allocation5 + $0x1280] sm:$0xff]
    %v661 = vld [vmem:[#allocation5 + $0x1288] sm:$0xff]
    %v662 = vld [vmem:[#allocation5 + $0x1290] sm:$0xff]
    %v663 = vld [vmem:[#allocation5 + $0x1298] sm:$0xff]
    %v664 = vld [vmem:[#allocation5 + $0x12a0] sm:$0xff]
    %v665 = vld [vmem:[#allocation5 + $0x12a8] sm:$0xff]
    %v666 = vld [vmem:[#allocation5 + $0x12b0] sm:$0xff]
    %v667 = vld [vmem:[#allocation5 + $0x12b8] sm:$0xff]
    %v668 = vld [vmem:[#allocation5 + $0x12c0] sm:$0xff]
    %v669 = vld [vmem:[#allocation5 + $0x12c8] sm:$0xff]
    %v670 = vld [vmem:[#allocation5 + $0x12d0] sm:$0xff]
    %v671 = vld [vmem:[#allocation5 + $0x12d8] sm:$0xff]
    %v672 = vld [vmem:[#allocation5 + $0x12e0] sm:$0xff]
    %v673 = vld [vmem:[#allocation5 + $0x12e8] sm:$0xff]
    %v674 = vld [vmem:[#allocation5 + $0x12f0] sm:$0xff]
    %v675 = vld [vmem:[#allocation5 + $0x12f8] sm:$0xff]
    %v676 = vld [vmem:[#allocation5 + $0x1300] sm:$0xff]
    %v677 = vld [vmem:[#allocation5 + $0x1308] sm:$0xff]
    %v678 = vld [vmem:[#allocation5 + $0x1310] sm:$0xff]
    %v679 = vld [vmem:[#allocation5 + $0x1318] sm:$0xff]
    %v680 = vld [vmem:[#allocation5 + $0x1320] sm:$0xff]
    %v681 = vld [vmem:[#allocation5 + $0x1328] sm:$0xff]
    %v682 = vld [vmem:[#allocation5 + $0x1330] sm:$0xff]
    %v683 = vld [vmem:[#allocation5 + $0x1338] sm:$0xff]
    %v684 = vld [vmem:[#allocation5 + $0x1340] sm:$0xff]
    %v685 = vld [vmem:[#allocation5 + $0x1348] sm:$0xff]
    %v686 = vld [vmem:[#allocation5 + $0x1350] sm:$0xff]
    %v687 = vld [vmem:[#allocation5 + $0x1358] sm:$0xff]
    %v688 = vld [vmem:[#allocation5 + $0x1360] sm:$0xff]
    %v689 = vld [vmem:[#allocation5 + $0x1368] sm:$0xff]
    %v690 = vld [vmem:[#allocation5 + $0x1370] sm:$0xff]
    %v691 = vld [vmem:[#allocation5 + $0x1378] sm:$0xff]
    %v692 = vld [vmem:[#allocation5 + $0x1380] sm:$0xff]
    %v693 = vld [vmem:[#allocation5 + $0x1388] sm:$0xff]
    %v694 = vld [vmem:[#allocation5 + $0x1390] sm:$0xff]
    %v695 = vld [vmem:[#allocation5 + $0x1398] sm:$0xff]
    %v696 = vld [vmem:[#allocation5 + $0x13a0] sm:$0xff]
    %v697 = vld [vmem:[#allocation5 + $0x13a8] sm:$0xff]
    %v698 = vld [vmem:[#allocation5 + $0x13b0] sm:$0xff]
    %v699 = vld [vmem:[#allocation5 + $0x13b8] sm:$0xff]
    %v700 = vld [vmem:[#allocation5 + $0x13c0] sm:$0xff]
    %v701 = vld [vmem:[#allocation5 + $0x13c8] sm:$0xff]
    %v702 = vld [vmem:[#allocation5 + $0x13d0] sm:$0xff]
    %v703 = vld [vmem:[#allocation5 + $0x13d8] sm:$0xff]
    %v704 = vld [vmem:[#allocation5 + $0x13e0] sm:$0xff]
    %v705 = vld [vmem:[#allocation5 + $0x13e8] sm:$0xff]
    %v706 = vld [vmem:[#allocation5 + $0x13f0] sm:$0xff]
    %v707 = vld [vmem:[#allocation5 + $0x13f8] sm:$0xff]
    %v708 = vld [vmem:[#allocation5 + $0x1400] sm:$0xff]
    %v709 = vld [vmem:[#allocation5 + $0x1408] sm:$0xff]
    %v710 = vld [vmem:[#allocation5 + $0x1410] sm:$0xff]
    %v711 = vld [vmem:[#allocation5 + $0x1418] sm:$0xff]
    %v712 = vld [vmem:[#allocation5 + $0x1420] sm:$0xff]
    %v713 = vld [vmem:[#allocation5 + $0x1428] sm:$0xff]
    %v714 = vld [vmem:[#allocation5 + $0x1430] sm:$0xff]
    %v715 = vld [vmem:[#allocation5 + $0x1438] sm:$0xff]
    %v716 = vld [vmem:[#allocation5 + $0x1440] sm:$0xff]
    %v717 = vld [vmem:[#allocation5 + $0x1448] sm:$0xff]
    %v718 = vld [vmem:[#allocation5 + $0x1450] sm:$0xff]
    %v719 = vld [vmem:[#allocation5 + $0x1458] sm:$0xff]
    %v720 = vld [vmem:[#allocation5 + $0x1460] sm:$0xff]
    %v721 = vld [vmem:[#allocation5 + $0x1468] sm:$0xff]
    %v722 = vld [vmem:[#allocation5 + $0x1470] sm:$0xff]
    %v723 = vld [vmem:[#allocation5 + $0x1478] sm:$0xff]
    %v724 = vld [vmem:[#allocation5 + $0x1480] sm:$0xff]
    %v725 = vld [vmem:[#allocation5 + $0x1488] sm:$0xff]
    %v726 = vld [vmem:[#allocation5 + $0x1490] sm:$0xff]
    %v727 = vld [vmem:[#allocation5 + $0x1498] sm:$0xff]
    %v728 = vld [vmem:[#allocation5 + $0x14a0] sm:$0xff]
    %v729 = vld [vmem:[#allocation5 + $0x14a8] sm:$0xff]
    %v730 = vld [vmem:[#allocation5 + $0x14b0] sm:$0xff]
    %v731 = vld [vmem:[#allocation5 + $0x14b8] sm:$0xff]
    %v732 = vld [vmem:[#allocation5 + $0x14c0] sm:$0xff]
    %v733 = vld [vmem:[#allocation5 + $0x14c8] sm:$0xff]
    %v734 = vld [vmem:[#allocation5 + $0x14d0] sm:$0xff]
    %v735 = vld [vmem:[#allocation5 + $0x14d8] sm:$0xff]
    %v736 = vld [vmem:[#allocation5 + $0x14e0] sm:$0xff]
    %v737 = vld [vmem:[#allocation5 + $0x14e8] sm:$0xff]
    %v738 = vld [vmem:[#allocation5 + $0x14f0] sm:$0xff]
    %v739 = vld [vmem:[#allocation5 + $0x14f8] sm:$0xff]
    %v740 = vld [vmem:[#allocation5 + $0x1500] sm:$0xff]
    %v741 = vld [vmem:[#allocation5 + $0x1508] sm:$0xff]
    %v742 = vld [vmem:[#allocation5 + $0x1510] sm:$0xff]
    %v743 = vld [vmem:[#allocation5 + $0x1518] sm:$0xff]
    %v744 = vld [vmem:[#allocation5 + $0x1520] sm:$0xff]
    %v745 = vld [vmem:[#allocation5 + $0x1528] sm:$0xff]
    %v746 = vld [vmem:[#allocation5 + $0x1530] sm:$0xff]
    %v747 = vld [vmem:[#allocation5 + $0x1538] sm:$0xff]
    %v748 = vld [vmem:[#allocation5 + $0x1540] sm:$0xff]
    %v749 = vld [vmem:[#allocation5 + $0x1548] sm:$0xff]
    %v750 = vld [vmem:[#allocation5 + $0x1550] sm:$0xff]
    %v751 = vld [vmem:[#allocation5 + $0x1558] sm:$0xff]
    %v752 = vld [vmem:[#allocation5 + $0x1560] sm:$0xff]
    %v753 = vld [vmem:[#allocation5 + $0x1568] sm:$0xff]
    %v754 = vld [vmem:[#allocation5 + $0x1570] sm:$0xff]
    %v755 = vld [vmem:[#allocation5 + $0x1578] sm:$0xff]
    %v756 = vld [vmem:[#allocation5 + $0x1580] sm:$0xff]
    %v757 = vld [vmem:[#allocation5 + $0x1588] sm:$0xff]
    %v758 = vld [vmem:[#allocation5 + $0x1590] sm:$0xff]
    %v759 = vld [vmem:[#allocation5 + $0x1598] sm:$0xff]
    %v760 = vld [vmem:[#allocation5 + $0x15a0] sm:$0xff]
    %v761 = vld [vmem:[#allocation5 + $0x15a8] sm:$0xff]
    %v762 = vld [vmem:[#allocation5 + $0x15b0] sm:$0xff]
    %v763 = vld [vmem:[#allocation5 + $0x15b8] sm:$0xff]
    %v764 = vld [vmem:[#allocation5 + $0x15c0] sm:$0xff]
    %v765 = vld [vmem:[#allocation5 + $0x15c8] sm:$0xff]
    %v766 = vld [vmem:[#allocation5 + $0x15d0] sm:$0xff]
    %v767 = vld [vmem:[#allocation5 + $0x15d8] sm:$0xff]
    %v768 = vld [vmem:[#allocation5 + $0x15e0] sm:$0xff]
    %v769 = vld [vmem:[#allocation5 + $0x15e8] sm:$0xff]
    %v770 = vld [vmem:[#allocation5 + $0x15f0] sm:$0xff]
    %v771 = vld [vmem:[#allocation5 + $0x15f8] sm:$0xff]
    %v772 = vld [vmem:[#allocation5 + $0x1600] sm:$0xff]
    %v773 = vld [vmem:[#allocation5 + $0x1608] sm:$0xff]
    %v774 = vld [vmem:[#allocation5 + $0x1610] sm:$0xff]
    %v775 = vld [vmem:[#allocation5 + $0x1618] sm:$0xff]
    %v776 = vld [vmem:[#allocation5 + $0x1620] sm:$0xff]
    %v777 = vld [vmem:[#allocation5 + $0x1628] sm:$0xff]
    %v778 = vld [vmem:[#allocation5 + $0x1630] sm:$0xff]
    %v779 = vld [vmem:[#allocation5 + $0x1638] sm:$0xff]
    %v780 = vld [vmem:[#allocation5 + $0x1640] sm:$0xff]
    %v781 = vld [vmem:[#allocation5 + $0x1648] sm:$0xff]
    %v782 = vld [vmem:[#allocation5 + $0x1650] sm:$0xff]
    %v783 = vld [vmem:[#allocation5 + $0x1658] sm:$0xff]
    %v784 = vld [vmem:[#allocation5 + $0x1660] sm:$0xff]
    %v785 = vld [vmem:[#allocation5 + $0x1668] sm:$0xff]
    %v786 = vld [vmem:[#allocation5 + $0x1670] sm:$0xff]
    %v787 = vld [vmem:[#allocation5 + $0x1678] sm:$0xff]
    %v788 = vld [vmem:[#allocation5 + $0x1680] sm:$0xff]
    %v789 = vld [vmem:[#allocation5 + $0x1688] sm:$0xff]
    %v790 = vld [vmem:[#allocation5 + $0x1690] sm:$0xff]
    %v791 = vld [vmem:[#allocation5 + $0x1698] sm:$0xff]
    %v792 = vld [vmem:[#allocation5 + $0x16a0] sm:$0xff]
    %v793 = vld [vmem:[#allocation5 + $0x16a8] sm:$0xff]
    %v794 = vld [vmem:[#allocation5 + $0x16b0] sm:$0xff]
    %v795 = vld [vmem:[#allocation5 + $0x16b8] sm:$0xff]
    %v796 = vld [vmem:[#allocation5 + $0x16c0] sm:$0xff]
    %v797 = vld [vmem:[#allocation5 + $0x16c8] sm:$0xff]
    %v798 = vld [vmem:[#allocation5 + $0x16d0] sm:$0xff]
    %v799 = vld [vmem:[#allocation5 + $0x16d8] sm:$0xff]
    %v800 = vld [vmem:[#allocation5 + $0x16e0] sm:$0xff]
    %v801 = vld [vmem:[#allocation5 + $0x16e8] sm:$0xff]
    %v802 = vld [vmem:[#allocation5 + $0x16f0] sm:$0xff]
    %v803 = vld [vmem:[#allocation5 + $0x16f8] sm:$0xff]
    %v804 = vld [vmem:[#allocation5 + $0x1700] sm:$0xff]
    %v805 = vld [vmem:[#allocation5 + $0x1708] sm:$0xff]
    %v806 = vld [vmem:[#allocation5 + $0x1710] sm:$0xff]
    %v807 = vld [vmem:[#allocation5 + $0x1718] sm:$0xff]
    %v808 = vld [vmem:[#allocation5 + $0x1720] sm:$0xff]
    %v809 = vld [vmem:[#allocation5 + $0x1728] sm:$0xff]
    %v810 = vld [vmem:[#allocation5 + $0x1730] sm:$0xff]
    %v811 = vld [vmem:[#allocation5 + $0x1738] sm:$0xff]
    %v812 = vld [vmem:[#allocation5 + $0x1740] sm:$0xff]
    %v813 = vld [vmem:[#allocation5 + $0x1748] sm:$0xff]
    %v814 = vld [vmem:[#allocation5 + $0x1750] sm:$0xff]
    %v815 = vld [vmem:[#allocation5 + $0x1758] sm:$0xff]
    %v816 = vld [vmem:[#allocation5 + $0x1760] sm:$0xff]
    %v817 = vld [vmem:[#allocation5 + $0x1768] sm:$0xff]
    %v818 = vld [vmem:[#allocation5 + $0x1770] sm:$0xff]
    %v819 = vld [vmem:[#allocation5 + $0x1778] sm:$0xff]
    %v820 = vld [vmem:[#allocation5 + $0x1780] sm:$0xff]
    %v821 = vld [vmem:[#allocation5 + $0x1788] sm:$0xff]
    %v822 = vld [vmem:[#allocation5 + $0x1790] sm:$0xff]
    %v823 = vld [vmem:[#allocation5 + $0x1798] sm:$0xff]
    %v824 = vld [vmem:[#allocation5 + $0x17a0] sm:$0xff]
    %v825 = vld [vmem:[#allocation5 + $0x17a8] sm:$0xff]
    %v826 = vld [vmem:[#allocation5 + $0x17b0] sm:$0xff]
    %v827 = vld [vmem:[#allocation5 + $0x17b8] sm:$0xff]
    %v828 = vld [vmem:[#allocation5 + $0x17c0] sm:$0xff]
    %v829 = vld [vmem:[#allocation5 + $0x17c8] sm:$0xff]
    %v830 = vld [vmem:[#allocation5 + $0x17d0] sm:$0xff]
    %v831 = vld [vmem:[#allocation5 + $0x17d8] sm:$0xff]
    %v832 = vld [vmem:[#allocation5 + $0x17e0] sm:$0xff]
    %v833 = vld [vmem:[#allocation5 + $0x17e8] sm:$0xff]
    %v834 = vld [vmem:[#allocation5 + $0x17f0] sm:$0xff]
    %v835 = vld [vmem:[#allocation5 + $0x17f8] sm:$0xff]
    %v836 = vld [vmem:[#allocation7] sm:$0xff]
    %v837 = vld [vmem:[#allocation7 + $0x8] sm:$0xf]
    %v840 = vperm.slane %v836, 0
    %v841 = vperm.slane %v836, 1
    %v842 = vperm.slane %v836, 2
    %v843 = vperm.slane %v836, 3
    %v844 = vperm.slane %v836, 4
    %v845 = vperm.slane %v836, 5
    %v846 = vperm.slane %v836, 6
    %v847 = vperm.slane %v836, 7
    %v848 = vperm.slane %v837, 0
    %v849 = vperm.slane %v837, 1
    %v850 = vperm.slane %v837, 2
    %v851 = vperm.slane %v837, 3
    %864 = vmatpush.msra.mxu0 %v248
    %865 = vmatpush.msra.mxu0 %v236
    %866 = vmatpush.msra.mxu0 %v224
    %867 = vmatpush.msra.mxu0 %v212
    %868 = vmatpush.msra.mxu0 %v200
    %869 = vmatpush.msra.mxu0 %v188
    %870 = vmatpush.msra.mxu0 %v176
    %871 = vmatpush.msra.mxu0 %v164
    %872 = vmatpush.msra.mxu0 %v152
    %873 = vmatpush.msra.mxu0 %v140
    %874 = vmatpush.msra.mxu0 %v128
    %875 = vmatpush.msra.mxu0 %v116
    %876 = vmatpush.msra.mxu0 %v104
    %877 = vmatpush.msra.mxu0 %v92
    %878 = vmatpush.msra.mxu0 %v80
    %879 = vmatpush.msra.mxu0 %v68
    %880 = vmatmul.f32.gmra.mxu0 %v60
    %v881 = vpop.f32.mrf.mxu0
    %v882 = vadd.f32 %v840, %v881
    %883 = vmatmul.f32.gmra.mxu0 %v64
    %v884 = vpop.f32.mrf.mxu0
    %v885 = vadd.f32 %v840, %v884
    %886 = vdwg.mxu0
    %887 = vmatpush.msra.mxu0 %v440
    %888 = vmatpush.msra.mxu0 %v428
    %889 = vmatpush.msra.mxu0 %v416
    %890 = vmatpush.msra.mxu0 %v404
    %891 = vmatpush.msra.mxu0 %v392
    %892 = vmatpush.msra.mxu0 %v380
    %893 = vmatpush.msra.mxu0 %v368
    %894 = vmatpush.msra.mxu0 %v356
    %895 = vmatpush.msra.mxu0 %v344
    %896 = vmatpush.msra.mxu0 %v332
    %897 = vmatpush.msra.mxu0 %v320
    %898 = vmatpush.msra.mxu0 %v308
    %899 = vmatpush.msra.mxu0 %v296
    %900 = vmatpush.msra.mxu0 %v284
    %901 = vmatpush.msra.mxu0 %v272
    %902 = vmatpush.msra.mxu0 %v260
    %903 = vmatmul.f32.gmra.mxu0 %v61
    %v904 = vpop.f32.mrf.mxu0
    %v905 = vadd.f32 %v882, %v904
    %906 = vmatmul.f32.gmra.mxu0 %v65
    %v907 = vpop.f32.mrf.mxu0
    %v908 = vadd.f32 %v885, %v907
    %909 = vdwg.mxu0
    %910 = vmatpush.msra.mxu0 %v632
    %911 = vmatpush.msra.mxu0 %v620
    %912 = vmatpush.msra.mxu0 %v608
    %913 = vmatpush.msra.mxu0 %v596
    %914 = vmatpush.msra.mxu0 %v584
    %915 = vmatpush.msra.mxu0 %v572
    %916 = vmatpush.msra.mxu0 %v560
    %917 = vmatpush.msra.mxu0 %v548
    %918 = vmatpush.msra.mxu0 %v536
    %919 = vmatpush.msra.mxu0 %v524
    %920 = vmatpush.msra.mxu0 %v512
    %921 = vmatpush.msra.mxu0 %v500
    %922 = vmatpush.msra.mxu0 %v488
    %923 = vmatpush.msra.mxu0 %v476
    %924 = vmatpush.msra.mxu0 %v464
    %925 = vmatpush.msra.mxu0 %v452
    %926 = vmatmul.f32.gmra.mxu0 %v62
    %v927 = vpop.f32.mrf.mxu0
    %v928 = vadd.f32 %v905, %v927
    %929 = vmatmul.f32.gmra.mxu0 %v66
    %v930 = vpop.f32.mrf.mxu0
    %v931 = vadd.f32 %v908, %v930
    %932 = vdwg.mxu0
    %933 = vmatpush.msra.mxu0 %v824
    %934 = vmatpush.msra.mxu0 %v812
    %935 = vmatpush.msra.mxu0 %v800
    %936 = vmatpush.msra.mxu0 %v788
    %937 = vmatpush.msra.mxu0 %v776
    %938 = vmatpush.msra.mxu0 %v764
    %939 = vmatpush.msra.mxu0 %v752
    %940 = vmatpush.msra.mxu0 %v740
    %941 = vmatpush.msra.mxu0 %v728
    %942 = vmatpush.msra.mxu0 %v716
    %943 = vmatpush.msra.mxu0 %v704
    %944 = vmatpush.msra.mxu0 %v692
    %945 = vmatpush.msra.mxu0 %v680
    %946 = vmatpush.msra.mxu0 %v668
    %947 = vmatpush.msra.mxu0 %v656
    %948 = vmatpush.msra.mxu0 %v644
    %949 = vmatmul.f32.gmra.mxu0 %v63
    %v950 = vpop.f32.mrf.mxu0
    %v951 = vadd.f32 %v928, %v950
    %952 = vmatmul.f32.gmra.mxu0 %v67
    %v953 = vpop.f32.mrf.mxu0
    %v954 = vadd.f32 %v931, %v953
    %955 = vdwg.mxu0
    %956 = vmatpush.msra.mxu0 %v249
    %957 = vmatpush.msra.mxu0 %v237
    %958 = vmatpush.msra.mxu0 %v225
    %959 = vmatpush.msra.mxu0 %v213
    %960 = vmatpush.msra.mxu0 %v201
    %961 = vmatpush.msra.mxu0 %v189
    %962 = vmatpush.msra.mxu0 %v177
    %963 = vmatpush.msra.mxu0 %v165
    %964 = vmatpush.msra.mxu0 %v153
    %965 = vmatpush.msra.mxu0 %v141
    %966 = vmatpush.msra.mxu0 %v129
    %967 = vmatpush.msra.mxu0 %v117
    %968 = vmatpush.msra.mxu0 %v105
    %969 = vmatpush.msra.mxu0 %v93
    %970 = vmatpush.msra.mxu0 %v81
    %971 = vmatpush.msra.mxu0 %v69
    %972 = vmatmul.f32.gmra.mxu0 %v60
    %v973 = vpop.f32.mrf.mxu0
    %v974 = vadd.f32 %v841, %v973
    %975 = vmatmul.f32.gmra.mxu0 %v64
    %v976 = vpop.f32.mrf.mxu0
    %v977 = vadd.f32 %v841, %v976
    %978 = vdwg.mxu0
    %979 = vmatpush.msra.mxu0 %v441
    %980 = vmatpush.msra.mxu0 %v429
    %981 = vmatpush.msra.mxu0 %v417
    %982 = vmatpush.msra.mxu0 %v405
    %983 = vmatpush.msra.mxu0 %v393
    %984 = vmatpush.msra.mxu0 %v381
    %985 = vmatpush.msra.mxu0 %v369
    %986 = vmatpush.msra.mxu0 %v357
    %987 = vmatpush.msra.mxu0 %v345
    %988 = vmatpush.msra.mxu0 %v333
    %989 = vmatpush.msra.mxu0 %v321
    %990 = vmatpush.msra.mxu0 %v309
    %991 = vmatpush.msra.mxu0 %v297
    %992 = vmatpush.msra.mxu0 %v285
    %993 = vmatpush.msra.mxu0 %v273
    %994 = vmatpush.msra.mxu0 %v261
    %995 = vmatmul.f32.gmra.mxu0 %v61
    %v996 = vpop.f32.mrf.mxu0
    %v997 = vadd.f32 %v974, %v996
    %998 = vmatmul.f32.gmra.mxu0 %v65
    %v999 = vpop.f32.mrf.mxu0
    %v1000 = vadd.f32 %v977, %v999
    %1001 = vdwg.mxu0
    %1002 = vmatpush.msra.mxu0 %v633
    %1003 = vmatpush.msra.mxu0 %v621
    %1004 = vmatpush.msra.mxu0 %v609
    %1005 = vmatpush.msra.mxu0 %v597
    %1006 = vmatpush.msra.mxu0 %v585
    %1007 = vmatpush.msra.mxu0 %v573
    %1008 = vmatpush.msra.mxu0 %v561
    %1009 = vmatpush.msra.mxu0 %v549
    %1010 = vmatpush.msra.mxu0 %v537
    %1011 = vmatpush.msra.mxu0 %v525
    %1012 = vmatpush.msra.mxu0 %v513
    %1013 = vmatpush.msra.mxu0 %v501
    %1014 = vmatpush.msra.mxu0 %v489
    %1015 = vmatpush.msra.mxu0 %v477
    %1016 = vmatpush.msra.mxu0 %v465
    %1017 = vmatpush.msra.mxu0 %v453
    %1018 = vmatmul.f32.gmra.mxu0 %v62
    %v1019 = vpop.f32.mrf.mxu0
    %v1020 = vadd.f32 %v997, %v1019
    %1021 = vmatmul.f32.gmra.mxu0 %v66
    %v1022 = vpop.f32.mrf.mxu0
    %v1023 = vadd.f32 %v1000, %v1022
    %1024 = vdwg.mxu0
    %1025 = vmatpush.msra.mxu0 %v825
    %1026 = vmatpush.msra.mxu0 %v813
    %1027 = vmatpush.msra.mxu0 %v801
    %1028 = vmatpush.msra.mxu0 %v789
    %1029 = vmatpush.msra.mxu0 %v777
    %1030 = vmatpush.msra.mxu0 %v765
    %1031 = vmatpush.msra.mxu0 %v753
    %1032 = vmatpush.msra.mxu0 %v741
    %1033 = vmatpush.msra.mxu0 %v729
    %1034 = vmatpush.msra.mxu0 %v717
    %1035 = vmatpush.msra.mxu0 %v705
    %1036 = vmatpush.msra.mxu0 %v693
    %1037 = vmatpush.msra.mxu0 %v681
    %1038 = vmatpush.msra.mxu0 %v669
    %1039 = vmatpush.msra.mxu0 %v657
    %1040 = vmatpush.msra.mxu0 %v645
    %1041 = vmatmul.f32.gmra.mxu0 %v63
    %v1042 = vpop.f32.mrf.mxu0
    %v1043 = vadd.f32 %v1020, %v1042
    %1044 = vmatmul.f32.gmra.mxu0 %v67
    %v1045 = vpop.f32.mrf.mxu0
    %v1046 = vadd.f32 %v1023, %v1045
    %1047 = vdwg.mxu0
    %1048 = vmatpush.msra.mxu0 %v250
    %1049 = vmatpush.msra.mxu0 %v238
    %1050 = vmatpush.msra.mxu0 %v226
    %1051 = vmatpush.msra.mxu0 %v214
    %1052 = vmatpush.msra.mxu0 %v202
    %1053 = vmatpush.msra.mxu0 %v190
    %1054 = vmatpush.msra.mxu0 %v178
    %1055 = vmatpush.msra.mxu0 %v166
    %1056 = vmatpush.msra.mxu0 %v154
    %1057 = vmatpush.msra.mxu0 %v142
    %1058 = vmatpush.msra.mxu0 %v130
    %1059 = vmatpush.msra.mxu0 %v118
    %1060 = vmatpush.msra.mxu0 %v106
    %1061 = vmatpush.msra.mxu0 %v94
    %1062 = vmatpush.msra.mxu0 %v82
    %1063 = vmatpush.msra.mxu0 %v70
    %1064 = vmatmul.f32.gmra.mxu0 %v60
    %v1065 = vpop.f32.mrf.mxu0
    %v1066 = vadd.f32 %v842, %v1065
    %1067 = vmatmul.f32.gmra.mxu0 %v64
    %v1068 = vpop.f32.mrf.mxu0
    %v1069 = vadd.f32 %v842, %v1068
    %1070 = vdwg.mxu0
    %1071 = vmatpush.msra.mxu0 %v442
    %1072 = vmatpush.msra.mxu0 %v430
    %1073 = vmatpush.msra.mxu0 %v418
    %1074 = vmatpush.msra.mxu0 %v406
    %1075 = vmatpush.msra.mxu0 %v394
    %1076 = vmatpush.msra.mxu0 %v382
    %1077 = vmatpush.msra.mxu0 %v370
    %1078 = vmatpush.msra.mxu0 %v358
    %1079 = vmatpush.msra.mxu0 %v346
    %1080 = vmatpush.msra.mxu0 %v334
    %1081 = vmatpush.msra.mxu0 %v322
    %1082 = vmatpush.msra.mxu0 %v310
    %1083 = vmatpush.msra.mxu0 %v298
    %1084 = vmatpush.msra.mxu0 %v286
    %1085 = vmatpush.msra.mxu0 %v274
    %1086 = vmatpush.msra.mxu0 %v262
    %1087 = vmatmul.f32.gmra.mxu0 %v61
    %v1088 = vpop.f32.mrf.mxu0
    %v1089 = vadd.f32 %v1066, %v1088
    %1090 = vmatmul.f32.gmra.mxu0 %v65
    %v1091 = vpop.f32.mrf.mxu0
    %v1092 = vadd.f32 %v1069, %v1091
    %1093 = vdwg.mxu0
    %1094 = vmatpush.msra.mxu0 %v634
    %1095 = vmatpush.msra.mxu0 %v622
    %1096 = vmatpush.msra.mxu0 %v610
    %1097 = vmatpush.msra.mxu0 %v598
    %1098 = vmatpush.msra.mxu0 %v586
    %1099 = vmatpush.msra.mxu0 %v574
    %1100 = vmatpush.msra.mxu0 %v562
    %1101 = vmatpush.msra.mxu0 %v550
    %1102 = vmatpush.msra.mxu0 %v538
    %1103 = vmatpush.msra.mxu0 %v526
    %1104 = vmatpush.msra.mxu0 %v514
    %1105 = vmatpush.msra.mxu0 %v502
    %1106 = vmatpush.msra.mxu0 %v490
    %1107 = vmatpush.msra.mxu0 %v478
    %1108 = vmatpush.msra.mxu0 %v466
    %1109 = vmatpush.msra.mxu0 %v454
    %1110 = vmatmul.f32.gmra.mxu0 %v62
    %v1111 = vpop.f32.mrf.mxu0
    %v1112 = vadd.f32 %v1089, %v1111
    %1113 = vmatmul.f32.gmra.mxu0 %v66
    %v1114 = vpop.f32.mrf.mxu0
    %v1115 = vadd.f32 %v1092, %v1114
    %1116 = vdwg.mxu0
    %1117 = vmatpush.msra.mxu0 %v826
    %1118 = vmatpush.msra.mxu0 %v814
    %1119 = vmatpush.msra.mxu0 %v802
    %1120 = vmatpush.msra.mxu0 %v790
    %1121 = vmatpush.msra.mxu0 %v778
    %1122 = vmatpush.msra.mxu0 %v766
    %1123 = vmatpush.msra.mxu0 %v754
    %1124 = vmatpush.msra.mxu0 %v742
    %1125 = vmatpush.msra.mxu0 %v730
    %1126 = vmatpush.msra.mxu0 %v718
    %1127 = vmatpush.msra.mxu0 %v706
    %1128 = vmatpush.msra.mxu0 %v694
    %1129 = vmatpush.msra.mxu0 %v682
    %1130 = vmatpush.msra.mxu0 %v670
    %1131 = vmatpush.msra.mxu0 %v658
    %1132 = vmatpush.msra.mxu0 %v646
    %1133 = vmatmul.f32.gmra.mxu0 %v63
    %v1134 = vpop.f32.mrf.mxu0
    %v1135 = vadd.f32 %v1112, %v1134
    %1136 = vmatmul.f32.gmra.mxu0 %v67
    %v1137 = vpop.f32.mrf.mxu0
    %v1138 = vadd.f32 %v1115, %v1137
    %1139 = vdwg.mxu0
    %1140 = vmatpush.msra.mxu0 %v251
    %1141 = vmatpush.msra.mxu0 %v239
    %1142 = vmatpush.msra.mxu0 %v227
    %1143 = vmatpush.msra.mxu0 %v215
    %1144 = vmatpush.msra.mxu0 %v203
    %1145 = vmatpush.msra.mxu0 %v191
    %1146 = vmatpush.msra.mxu0 %v179
    %1147 = vmatpush.msra.mxu0 %v167
    %1148 = vmatpush.msra.mxu0 %v155
    %1149 = vmatpush.msra.mxu0 %v143
    %1150 = vmatpush.msra.mxu0 %v131
    %1151 = vmatpush.msra.mxu0 %v119
    %1152 = vmatpush.msra.mxu0 %v107
    %1153 = vmatpush.msra.mxu0 %v95
    %1154 = vmatpush.msra.mxu0 %v83
    %1155 = vmatpush.msra.mxu0 %v71
    %1156 = vmatmul.f32.gmra.mxu0 %v60
    %v1157 = vpop.f32.mrf.mxu0
    %v1158 = vadd.f32 %v843, %v1157
    %1159 = vmatmul.f32.gmra.mxu0 %v64
    %v1160 = vpop.f32.mrf.mxu0
    %v1161 = vadd.f32 %v843, %v1160
    %1162 = vdwg.mxu0
    %1163 = vmatpush.msra.mxu0 %v443
    %1164 = vmatpush.msra.mxu0 %v431
    %1165 = vmatpush.msra.mxu0 %v419
    %1166 = vmatpush.msra.mxu0 %v407
    %1167 = vmatpush.msra.mxu0 %v395
    %1168 = vmatpush.msra.mxu0 %v383
    %1169 = vmatpush.msra.mxu0 %v371
    %1170 = vmatpush.msra.mxu0 %v359
    %1171 = vmatpush.msra.mxu0 %v347
    %1172 = vmatpush.msra.mxu0 %v335
    %1173 = vmatpush.msra.mxu0 %v323
    %1174 = vmatpush.msra.mxu0 %v311
    %1175 = vmatpush.msra.mxu0 %v299
    %1176 = vmatpush.msra.mxu0 %v287
    %1177 = vmatpush.msra.mxu0 %v275
    %1178 = vmatpush.msra.mxu0 %v263
    %1179 = vmatmul.f32.gmra.mxu0 %v61
    %v1180 = vpop.f32.mrf.mxu0
    %v1181 = vadd.f32 %v1158, %v1180
    %1182 = vmatmul.f32.gmra.mxu0 %v65
    %v1183 = vpop.f32.mrf.mxu0
    %v1184 = vadd.f32 %v1161, %v1183
    %1185 = vdwg.mxu0
    %1186 = vmatpush.msra.mxu0 %v635
    %1187 = vmatpush.msra.mxu0 %v623
    %1188 = vmatpush.msra.mxu0 %v611
    %1189 = vmatpush.msra.mxu0 %v599
    %1190 = vmatpush.msra.mxu0 %v587
    %1191 = vmatpush.msra.mxu0 %v575
    %1192 = vmatpush.msra.mxu0 %v563
    %1193 = vmatpush.msra.mxu0 %v551
    %1194 = vmatpush.msra.mxu0 %v539
    %1195 = vmatpush.msra.mxu0 %v527
    %1196 = vmatpush.msra.mxu0 %v515
    %1197 = vmatpush.msra.mxu0 %v503
    %1198 = vmatpush.msra.mxu0 %v491
    %1199 = vmatpush.msra.mxu0 %v479
    %1200 = vmatpush.msra.mxu0 %v467
    %1201 = vmatpush.msra.mxu0 %v455
    %1202 = vmatmul.f32.gmra.mxu0 %v62
    %v1203 = vpop.f32.mrf.mxu0
    %v1204 = vadd.f32 %v1181, %v1203
    %1205 = vmatmul.f32.gmra.mxu0 %v66
    %v1206 = vpop.f32.mrf.mxu0
    %v1207 = vadd.f32 %v1184, %v1206
    %1208 = vdwg.mxu0
    %1209 = vmatpush.msra.mxu0 %v827
    %1210 = vmatpush.msra.mxu0 %v815
    %1211 = vmatpush.msra.mxu0 %v803
    %1212 = vmatpush.msra.mxu0 %v791
    %1213 = vmatpush.msra.mxu0 %v779
    %1214 = vmatpush.msra.mxu0 %v767
    %1215 = vmatpush.msra.mxu0 %v755
    %1216 = vmatpush.msra.mxu0 %v743
    %1217 = vmatpush.msra.mxu0 %v731
    %1218 = vmatpush.msra.mxu0 %v719
    %1219 = vmatpush.msra.mxu0 %v707
    %1220 = vmatpush.msra.mxu0 %v695
    %1221 = vmatpush.msra.mxu0 %v683
    %1222 = vmatpush.msra.mxu0 %v671
    %1223 = vmatpush.msra.mxu0 %v659
    %1224 = vmatpush.msra.mxu0 %v647
    %1225 = vmatmul.f32.gmra.mxu0 %v63
    %v1226 = vpop.f32.mrf.mxu0
    %v1227 = vadd.f32 %v1204, %v1226
    %1228 = vmatmul.f32.gmra.mxu0 %v67
    %v1229 = vpop.f32.mrf.mxu0
    %v1230 = vadd.f32 %v1207, %v1229
    %1231 = vdwg.mxu0
    %1232 = vmatpush.msra.mxu0 %v252
    %1233 = vmatpush.msra.mxu0 %v240
    %1234 = vmatpush.msra.mxu0 %v228
    %1235 = vmatpush.msra.mxu0 %v216
    %1236 = vmatpush.msra.mxu0 %v204
    %1237 = vmatpush.msra.mxu0 %v192
    %1238 = vmatpush.msra.mxu0 %v180
    %1239 = vmatpush.msra.mxu0 %v168
    %1240 = vmatpush.msra.mxu0 %v156
    %1241 = vmatpush.msra.mxu0 %v144
    %1242 = vmatpush.msra.mxu0 %v132
    %1243 = vmatpush.msra.mxu0 %v120
    %1244 = vmatpush.msra.mxu0 %v108
    %1245 = vmatpush.msra.mxu0 %v96
    %1246 = vmatpush.msra.mxu0 %v84
    %1247 = vmatpush.msra.mxu0 %v72
    %1248 = vmatmul.f32.gmra.mxu0 %v60
    %v1249 = vpop.f32.mrf.mxu0
    %v1250 = vadd.f32 %v844, %v1249
    %1251 = vmatmul.f32.gmra.mxu0 %v64
    %v1252 = vpop.f32.mrf.mxu0
    %v1253 = vadd.f32 %v844, %v1252
    %1254 = vdwg.mxu0
    %1255 = vmatpush.msra.mxu0 %v444
    %1256 = vmatpush.msra.mxu0 %v432
    %1257 = vmatpush.msra.mxu0 %v420
    %1258 = vmatpush.msra.mxu0 %v408
    %1259 = vmatpush.msra.mxu0 %v396
    %1260 = vmatpush.msra.mxu0 %v384
    %1261 = vmatpush.msra.mxu0 %v372
    %1262 = vmatpush.msra.mxu0 %v360
    %1263 = vmatpush.msra.mxu0 %v348
    %1264 = vmatpush.msra.mxu0 %v336
    %1265 = vmatpush.msra.mxu0 %v324
    %1266 = vmatpush.msra.mxu0 %v312
    %1267 = vmatpush.msra.mxu0 %v300
    %1268 = vmatpush.msra.mxu0 %v288
    %1269 = vmatpush.msra.mxu0 %v276
    %1270 = vmatpush.msra.mxu0 %v264
    %1271 = vmatmul.f32.gmra.mxu0 %v61
    %v1272 = vpop.f32.mrf.mxu0
    %v1273 = vadd.f32 %v1250, %v1272
    %1274 = vmatmul.f32.gmra.mxu0 %v65
    %v1275 = vpop.f32.mrf.mxu0
    %v1276 = vadd.f32 %v1253, %v1275
    %1277 = vdwg.mxu0
    %1278 = vmatpush.msra.mxu0 %v636
    %1279 = vmatpush.msra.mxu0 %v624
    %1280 = vmatpush.msra.mxu0 %v612
    %1281 = vmatpush.msra.mxu0 %v600
    %1282 = vmatpush.msra.mxu0 %v588
    %1283 = vmatpush.msra.mxu0 %v576
    %1284 = vmatpush.msra.mxu0 %v564
    %1285 = vmatpush.msra.mxu0 %v552
    %1286 = vmatpush.msra.mxu0 %v540
    %1287 = vmatpush.msra.mxu0 %v528
    %1288 = vmatpush.msra.mxu0 %v516
    %1289 = vmatpush.msra.mxu0 %v504
    %1290 = vmatpush.msra.mxu0 %v492
    %1291 = vmatpush.msra.mxu0 %v480
    %1292 = vmatpush.msra.mxu0 %v468
    %1293 = vmatpush.msra.mxu0 %v456
    %1294 = vmatmul.f32.gmra.mxu0 %v62
    %v1295 = vpop.f32.mrf.mxu0
    %v1296 = vadd.f32 %v1273, %v1295
    %1297 = vmatmul.f32.gmra.mxu0 %v66
    %v1298 = vpop.f32.mrf.mxu0
    %v1299 = vadd.f32 %v1276, %v1298
    %1300 = vdwg.mxu0
    %1301 = vmatpush.msra.mxu0 %v828
    %1302 = vmatpush.msra.mxu0 %v816
    %1303 = vmatpush.msra.mxu0 %v804
    %1304 = vmatpush.msra.mxu0 %v792
    %1305 = vmatpush.msra.mxu0 %v780
    %1306 = vmatpush.msra.mxu0 %v768
    %1307 = vmatpush.msra.mxu0 %v756
    %1308 = vmatpush.msra.mxu0 %v744
    %1309 = vmatpush.msra.mxu0 %v732
    %1310 = vmatpush.msra.mxu0 %v720
    %1311 = vmatpush.msra.mxu0 %v708
    %1312 = vmatpush.msra.mxu0 %v696
    %1313 = vmatpush.msra.mxu0 %v684
    %1314 = vmatpush.msra.mxu0 %v672
    %1315 = vmatpush.msra.mxu0 %v660
    %1316 = vmatpush.msra.mxu0 %v648
    %1317 = vmatmul.f32.gmra.mxu0 %v63
    %v1318 = vpop.f32.mrf.mxu0
    %v1319 = vadd.f32 %v1296, %v1318
    %1320 = vmatmul.f32.gmra.mxu0 %v67
    %v1321 = vpop.f32.mrf.mxu0
    %v1322 = vadd.f32 %v1299, %v1321
    %1323 = vdwg.mxu0
    %1324 = vmatpush.msra.mxu0 %v253
    %1325 = vmatpush.msra.mxu0 %v241
    %1326 = vmatpush.msra.mxu0 %v229
    %1327 = vmatpush.msra.mxu0 %v217
    %1328 = vmatpush.msra.mxu0 %v205
    %1329 = vmatpush.msra.mxu0 %v193
    %1330 = vmatpush.msra.mxu0 %v181
    %1331 = vmatpush.msra.mxu0 %v169
    %1332 = vmatpush.msra.mxu0 %v157
    %1333 = vmatpush.msra.mxu0 %v145
    %1334 = vmatpush.msra.mxu0 %v133
    %1335 = vmatpush.msra.mxu0 %v121
    %1336 = vmatpush.msra.mxu0 %v109
    %1337 = vmatpush.msra.mxu0 %v97
    %1338 = vmatpush.msra.mxu0 %v85
    %1339 = vmatpush.msra.mxu0 %v73
    %1340 = vmatmul.f32.gmra.mxu0 %v60
    %v1341 = vpop.f32.mrf.mxu0
    %v1342 = vadd.f32 %v845, %v1341
    %1343 = vmatmul.f32.gmra.mxu0 %v64
    %v1344 = vpop.f32.mrf.mxu0
    %v1345 = vadd.f32 %v845, %v1344
    %1346 = vdwg.mxu0
    %1347 = vmatpush.msra.mxu0 %v445
    %1348 = vmatpush.msra.mxu0 %v433
    %1349 = vmatpush.msra.mxu0 %v421
    %1350 = vmatpush.msra.mxu0 %v409
    %1351 = vmatpush.msra.mxu0 %v397
    %1352 = vmatpush.msra.mxu0 %v385
    %1353 = vmatpush.msra.mxu0 %v373
    %1354 = vmatpush.msra.mxu0 %v361
    %1355 = vmatpush.msra.mxu0 %v349
    %1356 = vmatpush.msra.mxu0 %v337
    %1357 = vmatpush.msra.mxu0 %v325
    %1358 = vmatpush.msra.mxu0 %v313
    %1359 = vmatpush.msra.mxu0 %v301
    %1360 = vmatpush.msra.mxu0 %v289
    %1361 = vmatpush.msra.mxu0 %v277
    %1362 = vmatpush.msra.mxu0 %v265
    %1363 = vmatmul.f32.gmra.mxu0 %v61
    %v1364 = vpop.f32.mrf.mxu0
    %v1365 = vadd.f32 %v1342, %v1364
    %1366 = vmatmul.f32.gmra.mxu0 %v65
    %v1367 = vpop.f32.mrf.mxu0
    %v1368 = vadd.f32 %v1345, %v1367
    %1369 = vdwg.mxu0
    %1370 = vmatpush.msra.mxu0 %v637
    %1371 = vmatpush.msra.mxu0 %v625
    %1372 = vmatpush.msra.mxu0 %v613
    %1373 = vmatpush.msra.mxu0 %v601
    %1374 = vmatpush.msra.mxu0 %v589
    %1375 = vmatpush.msra.mxu0 %v577
    %1376 = vmatpush.msra.mxu0 %v565
    %1377 = vmatpush.msra.mxu0 %v553
    %1378 = vmatpush.msra.mxu0 %v541
    %1379 = vmatpush.msra.mxu0 %v529
    %1380 = vmatpush.msra.mxu0 %v517
    %1381 = vmatpush.msra.mxu0 %v505
    %1382 = vmatpush.msra.mxu0 %v493
    %1383 = vmatpush.msra.mxu0 %v481
    %1384 = vmatpush.msra.mxu0 %v469
    %1385 = vmatpush.msra.mxu0 %v457
    %1386 = vmatmul.f32.gmra.mxu0 %v62
    %v1387 = vpop.f32.mrf.mxu0
    %v1388 = vadd.f32 %v1365, %v1387
    %1389 = vmatmul.f32.gmra.mxu0 %v66
    %v1390 = vpop.f32.mrf.mxu0
    %v1391 = vadd.f32 %v1368, %v1390
    %1392 = vdwg.mxu0
    %1393 = vmatpush.msra.mxu0 %v829
    %1394 = vmatpush.msra.mxu0 %v817
    %1395 = vmatpush.msra.mxu0 %v805
    %1396 = vmatpush.msra.mxu0 %v793
    %1397 = vmatpush.msra.mxu0 %v781
    %1398 = vmatpush.msra.mxu0 %v769
    %1399 = vmatpush.msra.mxu0 %v757
    %1400 = vmatpush.msra.mxu0 %v745
    %1401 = vmatpush.msra.mxu0 %v733
    %1402 = vmatpush.msra.mxu0 %v721
    %1403 = vmatpush.msra.mxu0 %v709
    %1404 = vmatpush.msra.mxu0 %v697
    %1405 = vmatpush.msra.mxu0 %v685
    %1406 = vmatpush.msra.mxu0 %v673
    %1407 = vmatpush.msra.mxu0 %v661
    %1408 = vmatpush.msra.mxu0 %v649
    %1409 = vmatmul.f32.gmra.mxu0 %v63
    %v1410 = vpop.f32.mrf.mxu0
    %v1411 = vadd.f32 %v1388, %v1410
    %1412 = vmatmul.f32.gmra.mxu0 %v67
    %v1413 = vpop.f32.mrf.mxu0
    %v1414 = vadd.f32 %v1391, %v1413
    %1415 = vdwg.mxu0
    %1416 = vmatpush.msra.mxu0 %v254
    %1417 = vmatpush.msra.mxu0 %v242
    %1418 = vmatpush.msra.mxu0 %v230
    %1419 = vmatpush.msra.mxu0 %v218
    %1420 = vmatpush.msra.mxu0 %v206
    %1421 = vmatpush.msra.mxu0 %v194
    %1422 = vmatpush.msra.mxu0 %v182
    %1423 = vmatpush.msra.mxu0 %v170
    %1424 = vmatpush.msra.mxu0 %v158
    %1425 = vmatpush.msra.mxu0 %v146
    %1426 = vmatpush.msra.mxu0 %v134
    %1427 = vmatpush.msra.mxu0 %v122
    %1428 = vmatpush.msra.mxu0 %v110
    %1429 = vmatpush.msra.mxu0 %v98
    %1430 = vmatpush.msra.mxu0 %v86
    %1431 = vmatpush.msra.mxu0 %v74
    %1432 = vmatmul.f32.gmra.mxu0 %v60
    %v1433 = vpop.f32.mrf.mxu0
    %v1434 = vadd.f32 %v846, %v1433
    %1435 = vmatmul.f32.gmra.mxu0 %v64
    %v1436 = vpop.f32.mrf.mxu0
    %v1437 = vadd.f32 %v846, %v1436
    %1438 = vdwg.mxu0
    %1439 = vmatpush.msra.mxu0 %v446
    %1440 = vmatpush.msra.mxu0 %v434
    %1441 = vmatpush.msra.mxu0 %v422
    %1442 = vmatpush.msra.mxu0 %v410
    %1443 = vmatpush.msra.mxu0 %v398
    %1444 = vmatpush.msra.mxu0 %v386
    %1445 = vmatpush.msra.mxu0 %v374
    %1446 = vmatpush.msra.mxu0 %v362
    %1447 = vmatpush.msra.mxu0 %v350
    %1448 = vmatpush.msra.mxu0 %v338
    %1449 = vmatpush.msra.mxu0 %v326
    %1450 = vmatpush.msra.mxu0 %v314
    %1451 = vmatpush.msra.mxu0 %v302
    %1452 = vmatpush.msra.mxu0 %v290
    %1453 = vmatpush.msra.mxu0 %v278
    %1454 = vmatpush.msra.mxu0 %v266
    %1455 = vmatmul.f32.gmra.mxu0 %v61
    %v1456 = vpop.f32.mrf.mxu0
    %v1457 = vadd.f32 %v1434, %v1456
    %1458 = vmatmul.f32.gmra.mxu0 %v65
    %v1459 = vpop.f32.mrf.mxu0
    %v1460 = vadd.f32 %v1437, %v1459
    %1461 = vdwg.mxu0
    %1462 = vmatpush.msra.mxu0 %v638
    %1463 = vmatpush.msra.mxu0 %v626
    %1464 = vmatpush.msra.mxu0 %v614
    %1465 = vmatpush.msra.mxu0 %v602
    %1466 = vmatpush.msra.mxu0 %v590
    %1467 = vmatpush.msra.mxu0 %v578
    %1468 = vmatpush.msra.mxu0 %v566
    %1469 = vmatpush.msra.mxu0 %v554
    %1470 = vmatpush.msra.mxu0 %v542
    %1471 = vmatpush.msra.mxu0 %v530
    %1472 = vmatpush.msra.mxu0 %v518
    %1473 = vmatpush.msra.mxu0 %v506
    %1474 = vmatpush.msra.mxu0 %v494
    %1475 = vmatpush.msra.mxu0 %v482
    %1476 = vmatpush.msra.mxu0 %v470
    %1477 = vmatpush.msra.mxu0 %v458
    %1478 = vmatmul.f32.gmra.mxu0 %v62
    %v1479 = vpop.f32.mrf.mxu0
    %v1480 = vadd.f32 %v1457, %v1479
    %1481 = vmatmul.f32.gmra.mxu0 %v66
    %v1482 = vpop.f32.mrf.mxu0
    %v1483 = vadd.f32 %v1460, %v1482
    %1484 = vdwg.mxu0
    %1485 = vmatpush.msra.mxu0 %v830
    %1486 = vmatpush.msra.mxu0 %v818
    %1487 = vmatpush.msra.mxu0 %v806
    %1488 = vmatpush.msra.mxu0 %v794
    %1489 = vmatpush.msra.mxu0 %v782
    %1490 = vmatpush.msra.mxu0 %v770
    %1491 = vmatpush.msra.mxu0 %v758
    %1492 = vmatpush.msra.mxu0 %v746
    %1493 = vmatpush.msra.mxu0 %v734
    %1494 = vmatpush.msra.mxu0 %v722
    %1495 = vmatpush.msra.mxu0 %v710
    %1496 = vmatpush.msra.mxu0 %v698
    %1497 = vmatpush.msra.mxu0 %v686
    %1498 = vmatpush.msra.mxu0 %v674
    %1499 = vmatpush.msra.mxu0 %v662
    %1500 = vmatpush.msra.mxu0 %v650
    %1501 = vmatmul.f32.gmra.mxu0 %v63
    %v1502 = vpop.f32.mrf.mxu0
    %v1503 = vadd.f32 %v1480, %v1502
    %1504 = vmatmul.f32.gmra.mxu0 %v67
    %v1505 = vpop.f32.mrf.mxu0
    %v1506 = vadd.f32 %v1483, %v1505
    %1507 = vdwg.mxu0
    %1508 = vmatpush.msra.mxu0 %v255
    %1509 = vmatpush.msra.mxu0 %v243
    %1510 = vmatpush.msra.mxu0 %v231
    %1511 = vmatpush.msra.mxu0 %v219
    %1512 = vmatpush.msra.mxu0 %v207
    %1513 = vmatpush.msra.mxu0 %v195
    %1514 = vmatpush.msra.mxu0 %v183
    %1515 = vmatpush.msra.mxu0 %v171
    %1516 = vmatpush.msra.mxu0 %v159
    %1517 = vmatpush.msra.mxu0 %v147
    %1518 = vmatpush.msra.mxu0 %v135
    %1519 = vmatpush.msra.mxu0 %v123
    %1520 = vmatpush.msra.mxu0 %v111
    %1521 = vmatpush.msra.mxu0 %v99
    %1522 = vmatpush.msra.mxu0 %v87
    %1523 = vmatpush.msra.mxu0 %v75
    %1524 = vmatmul.f32.gmra.mxu0 %v60
    %v1525 = vpop.f32.mrf.mxu0
    %v1526 = vadd.f32 %v847, %v1525
    %1527 = vmatmul.f32.gmra.mxu0 %v64
    %v1528 = vpop.f32.mrf.mxu0
    %v1529 = vadd.f32 %v847, %v1528
    %1530 = vdwg.mxu0
    %1531 = vmatpush.msra.mxu0 %v447
    %1532 = vmatpush.msra.mxu0 %v435
    %1533 = vmatpush.msra.mxu0 %v423
    %1534 = vmatpush.msra.mxu0 %v411
    %1535 = vmatpush.msra.mxu0 %v399
    %1536 = vmatpush.msra.mxu0 %v387
    %1537 = vmatpush.msra.mxu0 %v375
    %1538 = vmatpush.msra.mxu0 %v363
    %1539 = vmatpush.msra.mxu0 %v351
    %1540 = vmatpush.msra.mxu0 %v339
    %1541 = vmatpush.msra.mxu0 %v327
    %1542 = vmatpush.msra.mxu0 %v315
    %1543 = vmatpush.msra.mxu0 %v303
    %1544 = vmatpush.msra.mxu0 %v291
    %1545 = vmatpush.msra.mxu0 %v279
    %1546 = vmatpush.msra.mxu0 %v267
    %1547 = vmatmul.f32.gmra.mxu0 %v61
    %v1548 = vpop.f32.mrf.mxu0
    %v1549 = vadd.f32 %v1526, %v1548
    %1550 = vmatmul.f32.gmra.mxu0 %v65
    %v1551 = vpop.f32.mrf.mxu0
    %v1552 = vadd.f32 %v1529, %v1551
    %1553 = vdwg.mxu0
    %1554 = vmatpush.msra.mxu0 %v639
    %1555 = vmatpush.msra.mxu0 %v627
    %1556 = vmatpush.msra.mxu0 %v615
    %1557 = vmatpush.msra.mxu0 %v603
    %1558 = vmatpush.msra.mxu0 %v591
    %1559 = vmatpush.msra.mxu0 %v579
    %1560 = vmatpush.msra.mxu0 %v567
    %1561 = vmatpush.msra.mxu0 %v555
    %1562 = vmatpush.msra.mxu0 %v543
    %1563 = vmatpush.msra.mxu0 %v531
    %1564 = vmatpush.msra.mxu0 %v519
    %1565 = vmatpush.msra.mxu0 %v507
    %1566 = vmatpush.msra.mxu0 %v495
    %1567 = vmatpush.msra.mxu0 %v483
    %1568 = vmatpush.msra.mxu0 %v471
    %1569 = vmatpush.msra.mxu0 %v459
    %1570 = vmatmul.f32.gmra.mxu0 %v62
    %v1571 = vpop.f32.mrf.mxu0
    %v1572 = vadd.f32 %v1549, %v1571
    %1573 = vmatmul.f32.gmra.mxu0 %v66
    %v1574 = vpop.f32.mrf.mxu0
    %v1575 = vadd.f32 %v1552, %v1574
    %1576 = vdwg.mxu0
    %1577 = vmatpush.msra.mxu0 %v831
    %1578 = vmatpush.msra.mxu0 %v819
    %1579 = vmatpush.msra.mxu0 %v807
    %1580 = vmatpush.msra.mxu0 %v795
    %1581 = vmatpush.msra.mxu0 %v783
    %1582 = vmatpush.msra.mxu0 %v771
    %1583 = vmatpush.msra.mxu0 %v759
    %1584 = vmatpush.msra.mxu0 %v747
    %1585 = vmatpush.msra.mxu0 %v735
    %1586 = vmatpush.msra.mxu0 %v723
    %1587 = vmatpush.msra.mxu0 %v711
    %1588 = vmatpush.msra.mxu0 %v699
    %1589 = vmatpush.msra.mxu0 %v687
    %1590 = vmatpush.msra.mxu0 %v675
    %1591 = vmatpush.msra.mxu0 %v663
    %1592 = vmatpush.msra.mxu0 %v651
    %1593 = vmatmul.f32.gmra.mxu0 %v63
    %v1594 = vpop.f32.mrf.mxu0
    %v1595 = vadd.f32 %v1572, %v1594
    %1596 = vmatmul.f32.gmra.mxu0 %v67
    %v1597 = vpop.f32.mrf.mxu0
    %v1598 = vadd.f32 %v1575, %v1597
    %1599 = vdwg.mxu0
    %1600 = vmatpush.msra.mxu0 %v256
    %1601 = vmatpush.msra.mxu0 %v244
    %1602 = vmatpush.msra.mxu0 %v232
    %1603 = vmatpush.msra.mxu0 %v220
    %1604 = vmatpush.msra.mxu0 %v208
    %1605 = vmatpush.msra.mxu0 %v196
    %1606 = vmatpush.msra.mxu0 %v184
    %1607 = vmatpush.msra.mxu0 %v172
    %1608 = vmatpush.msra.mxu0 %v160
    %1609 = vmatpush.msra.mxu0 %v148
    %1610 = vmatpush.msra.mxu0 %v136
    %1611 = vmatpush.msra.mxu0 %v124
    %1612 = vmatpush.msra.mxu0 %v112
    %1613 = vmatpush.msra.mxu0 %v100
    %1614 = vmatpush.msra.mxu0 %v88
    %1615 = vmatpush.msra.mxu0 %v76
    %1616 = vmatmul.f32.gmra.mxu0 %v60
    %v1617 = vpop.f32.mrf.mxu0
    %v1618 = vadd.f32 %v848, %v1617
    %1619 = vmatmul.f32.gmra.mxu0 %v64
    %v1620 = vpop.f32.mrf.mxu0
    %v1621 = vadd.f32 %v848, %v1620
    %1622 = vdwg.mxu0
    %1623 = vmatpush.msra.mxu0 %v448
    %1624 = vmatpush.msra.mxu0 %v436
    %1625 = vmatpush.msra.mxu0 %v424
    %1626 = vmatpush.msra.mxu0 %v412
    %1627 = vmatpush.msra.mxu0 %v400
    %1628 = vmatpush.msra.mxu0 %v388
    %1629 = vmatpush.msra.mxu0 %v376
    %1630 = vmatpush.msra.mxu0 %v364
    %1631 = vmatpush.msra.mxu0 %v352
    %1632 = vmatpush.msra.mxu0 %v340
    %1633 = vmatpush.msra.mxu0 %v328
    %1634 = vmatpush.msra.mxu0 %v316
    %1635 = vmatpush.msra.mxu0 %v304
    %1636 = vmatpush.msra.mxu0 %v292
    %1637 = vmatpush.msra.mxu0 %v280
    %1638 = vmatpush.msra.mxu0 %v268
    %1639 = vmatmul.f32.gmra.mxu0 %v61
    %v1640 = vpop.f32.mrf.mxu0
    %v1641 = vadd.f32 %v1618, %v1640
    %1642 = vmatmul.f32.gmra.mxu0 %v65
    %v1643 = vpop.f32.mrf.mxu0
    %v1644 = vadd.f32 %v1621, %v1643
    %1645 = vdwg.mxu0
    %1646 = vmatpush.msra.mxu0 %v640
    %1647 = vmatpush.msra.mxu0 %v628
    %1648 = vmatpush.msra.mxu0 %v616
    %1649 = vmatpush.msra.mxu0 %v604
    %1650 = vmatpush.msra.mxu0 %v592
    %1651 = vmatpush.msra.mxu0 %v580
    %1652 = vmatpush.msra.mxu0 %v568
    %1653 = vmatpush.msra.mxu0 %v556
    %1654 = vmatpush.msra.mxu0 %v544
    %1655 = vmatpush.msra.mxu0 %v532
    %1656 = vmatpush.msra.mxu0 %v520
    %1657 = vmatpush.msra.mxu0 %v508
    %1658 = vmatpush.msra.mxu0 %v496
    %1659 = vmatpush.msra.mxu0 %v484
    %1660 = vmatpush.msra.mxu0 %v472
    %1661 = vmatpush.msra.mxu0 %v460
    %1662 = vmatmul.f32.gmra.mxu0 %v62
    %v1663 = vpop.f32.mrf.mxu0
    %v1664 = vadd.f32 %v1641, %v1663
    %1665 = vmatmul.f32.gmra.mxu0 %v66
    %v1666 = vpop.f32.mrf.mxu0
    %v1667 = vadd.f32 %v1644, %v1666
    %1668 = vdwg.mxu0
    %1669 = vmatpush.msra.mxu0 %v832
    %1670 = vmatpush.msra.mxu0 %v820
    %1671 = vmatpush.msra.mxu0 %v808
    %1672 = vmatpush.msra.mxu0 %v796
    %1673 = vmatpush.msra.mxu0 %v784
    %1674 = vmatpush.msra.mxu0 %v772
    %1675 = vmatpush.msra.mxu0 %v760
    %1676 = vmatpush.msra.mxu0 %v748
    %1677 = vmatpush.msra.mxu0 %v736
    %1678 = vmatpush.msra.mxu0 %v724
    %1679 = vmatpush.msra.mxu0 %v712
    %1680 = vmatpush.msra.mxu0 %v700
    %1681 = vmatpush.msra.mxu0 %v688
    %1682 = vmatpush.msra.mxu0 %v676
    %1683 = vmatpush.msra.mxu0 %v664
    %1684 = vmatpush.msra.mxu0 %v652
    %1685 = vmatmul.f32.gmra.mxu0 %v63
    %v1686 = vpop.f32.mrf.mxu0
    %v1687 = vadd.f32 %v1664, %v1686
    %1688 = vmatmul.f32.gmra.mxu0 %v67
    %v1689 = vpop.f32.mrf.mxu0
    %v1690 = vadd.f32 %v1667, %v1689
    %1691 = vdwg.mxu0
    %1692 = vmatpush.msra.mxu0 %v257
    %1693 = vmatpush.msra.mxu0 %v245
    %1694 = vmatpush.msra.mxu0 %v233
    %1695 = vmatpush.msra.mxu0 %v221
    %1696 = vmatpush.msra.mxu0 %v209
    %1697 = vmatpush.msra.mxu0 %v197
    %1698 = vmatpush.msra.mxu0 %v185
    %1699 = vmatpush.msra.mxu0 %v173
    %1700 = vmatpush.msra.mxu0 %v161
    %1701 = vmatpush.msra.mxu0 %v149
    %1702 = vmatpush.msra.mxu0 %v137
    %1703 = vmatpush.msra.mxu0 %v125
    %1704 = vmatpush.msra.mxu0 %v113
    %1705 = vmatpush.msra.mxu0 %v101
    %1706 = vmatpush.msra.mxu0 %v89
    %1707 = vmatpush.msra.mxu0 %v77
    %1708 = vmatmul.f32.gmra.mxu0 %v60
    %v1709 = vpop.f32.mrf.mxu0
    %v1710 = vadd.f32 %v849, %v1709
    %1711 = vmatmul.f32.gmra.mxu0 %v64
    %v1712 = vpop.f32.mrf.mxu0
    %v1713 = vadd.f32 %v849, %v1712
    %1714 = vdwg.mxu0
    %1715 = vmatpush.msra.mxu0 %v449
    %1716 = vmatpush.msra.mxu0 %v437
    %1717 = vmatpush.msra.mxu0 %v425
    %1718 = vmatpush.msra.mxu0 %v413
    %1719 = vmatpush.msra.mxu0 %v401
    %1720 = vmatpush.msra.mxu0 %v389
    %1721 = vmatpush.msra.mxu0 %v377
    %1722 = vmatpush.msra.mxu0 %v365
    %1723 = vmatpush.msra.mxu0 %v353
    %1724 = vmatpush.msra.mxu0 %v341
    %1725 = vmatpush.msra.mxu0 %v329
    %1726 = vmatpush.msra.mxu0 %v317
    %1727 = vmatpush.msra.mxu0 %v305
    %1728 = vmatpush.msra.mxu0 %v293
    %1729 = vmatpush.msra.mxu0 %v281
    %1730 = vmatpush.msra.mxu0 %v269
    %1731 = vmatmul.f32.gmra.mxu0 %v61
    %v1732 = vpop.f32.mrf.mxu0
    %v1733 = vadd.f32 %v1710, %v1732
    %1734 = vmatmul.f32.gmra.mxu0 %v65
    %v1735 = vpop.f32.mrf.mxu0
    %v1736 = vadd.f32 %v1713, %v1735
    %1737 = vdwg.mxu0
    %1738 = vmatpush.msra.mxu0 %v641
    %1739 = vmatpush.msra.mxu0 %v629
    %1740 = vmatpush.msra.mxu0 %v617
    %1741 = vmatpush.msra.mxu0 %v605
    %1742 = vmatpush.msra.mxu0 %v593
    %1743 = vmatpush.msra.mxu0 %v581
    %1744 = vmatpush.msra.mxu0 %v569
    %1745 = vmatpush.msra.mxu0 %v557
    %1746 = vmatpush.msra.mxu0 %v545
    %1747 = vmatpush.msra.mxu0 %v533
    %1748 = vmatpush.msra.mxu0 %v521
    %1749 = vmatpush.msra.mxu0 %v509
    %1750 = vmatpush.msra.mxu0 %v497
    %1751 = vmatpush.msra.mxu0 %v485
    %1752 = vmatpush.msra.mxu0 %v473
    %1753 = vmatpush.msra.mxu0 %v461
    %1754 = vmatmul.f32.gmra.mxu0 %v62
    %v1755 = vpop.f32.mrf.mxu0
    %v1756 = vadd.f32 %v1733, %v1755
    %1757 = vmatmul.f32.gmra.mxu0 %v66
    %v1758 = vpop.f32.mrf.mxu0
    %v1759 = vadd.f32 %v1736, %v1758
    %1760 = vdwg.mxu0
    %1761 = vmatpush.msra.mxu0 %v833
    %1762 = vmatpush.msra.mxu0 %v821
    %1763 = vmatpush.msra.mxu0 %v809
    %1764 = vmatpush.msra.mxu0 %v797
    %1765 = vmatpush.msra.mxu0 %v785
    %1766 = vmatpush.msra.mxu0 %v773
    %1767 = vmatpush.msra.mxu0 %v761
    %1768 = vmatpush.msra.mxu0 %v749
    %1769 = vmatpush.msra.mxu0 %v737
    %1770 = vmatpush.msra.mxu0 %v725
    %1771 = vmatpush.msra.mxu0 %v713
    %1772 = vmatpush.msra.mxu0 %v701
    %1773 = vmatpush.msra.mxu0 %v689
    %1774 = vmatpush.msra.mxu0 %v677
    %1775 = vmatpush.msra.mxu0 %v665
    %1776 = vmatpush.msra.mxu0 %v653
    %1777 = vmatmul.f32.gmra.mxu0 %v63
    %v1778 = vpop.f32.mrf.mxu0
    %v1779 = vadd.f32 %v1756, %v1778
    %1780 = vmatmul.f32.gmra.mxu0 %v67
    %v1781 = vpop.f32.mrf.mxu0
    %v1782 = vadd.f32 %v1759, %v1781
    %1783 = vdwg.mxu0
    %1784 = vmatpush.msra.mxu0 %v258
    %1785 = vmatpush.msra.mxu0 %v246
    %1786 = vmatpush.msra.mxu0 %v234
    %1787 = vmatpush.msra.mxu0 %v222
    %1788 = vmatpush.msra.mxu0 %v210
    %1789 = vmatpush.msra.mxu0 %v198
    %1790 = vmatpush.msra.mxu0 %v186
    %1791 = vmatpush.msra.mxu0 %v174
    %1792 = vmatpush.msra.mxu0 %v162
    %1793 = vmatpush.msra.mxu0 %v150
    %1794 = vmatpush.msra.mxu0 %v138
    %1795 = vmatpush.msra.mxu0 %v126
    %1796 = vmatpush.msra.mxu0 %v114
    %1797 = vmatpush.msra.mxu0 %v102
    %1798 = vmatpush.msra.mxu0 %v90
    %1799 = vmatpush.msra.mxu0 %v78
    %1800 = vmatmul.f32.gmra.mxu0 %v60
    %v1801 = vpop.f32.mrf.mxu0
    %v1802 = vadd.f32 %v850, %v1801
    %1803 = vmatmul.f32.gmra.mxu0 %v64
    %v1804 = vpop.f32.mrf.mxu0
    %v1805 = vadd.f32 %v850, %v1804
    %1806 = vdwg.mxu0
    %1807 = vmatpush.msra.mxu0 %v450
    %1808 = vmatpush.msra.mxu0 %v438
    %1809 = vmatpush.msra.mxu0 %v426
    %1810 = vmatpush.msra.mxu0 %v414
    %1811 = vmatpush.msra.mxu0 %v402
    %1812 = vmatpush.msra.mxu0 %v390
    %1813 = vmatpush.msra.mxu0 %v378
    %1814 = vmatpush.msra.mxu0 %v366
    %1815 = vmatpush.msra.mxu0 %v354
    %1816 = vmatpush.msra.mxu0 %v342
    %1817 = vmatpush.msra.mxu0 %v330
    %1818 = vmatpush.msra.mxu0 %v318
    %1819 = vmatpush.msra.mxu0 %v306
    %1820 = vmatpush.msra.mxu0 %v294
    %1821 = vmatpush.msra.mxu0 %v282
    %1822 = vmatpush.msra.mxu0 %v270
    %1823 = vmatmul.f32.gmra.mxu0 %v61
    %v1824 = vpop.f32.mrf.mxu0
    %v1825 = vadd.f32 %v1802, %v1824
    %1826 = vmatmul.f32.gmra.mxu0 %v65
    %v1827 = vpop.f32.mrf.mxu0
    %v1828 = vadd.f32 %v1805, %v1827
    %1829 = vdwg.mxu0
    %1830 = vmatpush.msra.mxu0 %v642
    %1831 = vmatpush.msra.mxu0 %v630
    %1832 = vmatpush.msra.mxu0 %v618
    %1833 = vmatpush.msra.mxu0 %v606
    %1834 = vmatpush.msra.mxu0 %v594
    %1835 = vmatpush.msra.mxu0 %v582
    %1836 = vmatpush.msra.mxu0 %v570
    %1837 = vmatpush.msra.mxu0 %v558
    %1838 = vmatpush.msra.mxu0 %v546
    %1839 = vmatpush.msra.mxu0 %v534
    %1840 = vmatpush.msra.mxu0 %v522
    %1841 = vmatpush.msra.mxu0 %v510
    %1842 = vmatpush.msra.mxu0 %v498
    %1843 = vmatpush.msra.mxu0 %v486
    %1844 = vmatpush.msra.mxu0 %v474
    %1845 = vmatpush.msra.mxu0 %v462
    %1846 = vmatmul.f32.gmra.mxu0 %v62
    %v1847 = vpop.f32.mrf.mxu0
    %v1848 = vadd.f32 %v1825, %v1847
    %1849 = vmatmul.f32.gmra.mxu0 %v66
    %v1850 = vpop.f32.mrf.mxu0
    %v1851 = vadd.f32 %v1828, %v1850
    %1852 = vdwg.mxu0
    %1853 = vmatpush.msra.mxu0 %v834
    %1854 = vmatpush.msra.mxu0 %v822
    %1855 = vmatpush.msra.mxu0 %v810
    %1856 = vmatpush.msra.mxu0 %v798
    %1857 = vmatpush.msra.mxu0 %v786
    %1858 = vmatpush.msra.mxu0 %v774
    %1859 = vmatpush.msra.mxu0 %v762
    %1860 = vmatpush.msra.mxu0 %v750
    %1861 = vmatpush.msra.mxu0 %v738
    %1862 = vmatpush.msra.mxu0 %v726
    %1863 = vmatpush.msra.mxu0 %v714
    %1864 = vmatpush.msra.mxu0 %v702
    %1865 = vmatpush.msra.mxu0 %v690
    %1866 = vmatpush.msra.mxu0 %v678
    %1867 = vmatpush.msra.mxu0 %v666
    %1868 = vmatpush.msra.mxu0 %v654
    %1869 = vmatmul.f32.gmra.mxu0 %v63
    %v1870 = vpop.f32.mrf.mxu0
    %v1871 = vadd.f32 %v1848, %v1870
    %1872 = vmatmul.f32.gmra.mxu0 %v67
    %v1873 = vpop.f32.mrf.mxu0
    %v1874 = vadd.f32 %v1851, %v1873
    %1875 = vdwg.mxu0
    %1876 = vmatpush.msra.mxu0 %v259
    %1877 = vmatpush.msra.mxu0 %v247
    %1878 = vmatpush.msra.mxu0 %v235
    %1879 = vmatpush.msra.mxu0 %v223
    %1880 = vmatpush.msra.mxu0 %v211
    %1881 = vmatpush.msra.mxu0 %v199
    %1882 = vmatpush.msra.mxu0 %v187
    %1883 = vmatpush.msra.mxu0 %v175
    %1884 = vmatpush.msra.mxu0 %v163
    %1885 = vmatpush.msra.mxu0 %v151
    %1886 = vmatpush.msra.mxu0 %v139
    %1887 = vmatpush.msra.mxu0 %v127
    %1888 = vmatpush.msra.mxu0 %v115
    %1889 = vmatpush.msra.mxu0 %v103
    %1890 = vmatpush.msra.mxu0 %v91
    %1891 = vmatpush.msra.mxu0 %v79
    %1892 = vmatmul.f32.gmra.mxu0 %v60
    %v1893 = vpop.f32.mrf.mxu0
    %v1894 = vadd.f32 %v851, %v1893
    %1895 = vmatmul.f32.gmra.mxu0 %v64
    %v1896 = vpop.f32.mrf.mxu0
    %v1897 = vadd.f32 %v851, %v1896
    %1898 = vdwg.mxu0
    %1899 = vmatpush.msra.mxu0 %v451
    %1900 = vmatpush.msra.mxu0 %v439
    %1901 = vmatpush.msra.mxu0 %v427
    %1902 = vmatpush.msra.mxu0 %v415
    %1903 = vmatpush.msra.mxu0 %v403
    %1904 = vmatpush.msra.mxu0 %v391
    %1905 = vmatpush.msra.mxu0 %v379
    %1906 = vmatpush.msra.mxu0 %v367
    %1907 = vmatpush.msra.mxu0 %v355
    %1908 = vmatpush.msra.mxu0 %v343
    %1909 = vmatpush.msra.mxu0 %v331
    %1910 = vmatpush.msra.mxu0 %v319
    %1911 = vmatpush.msra.mxu0 %v307
    %1912 = vmatpush.msra.mxu0 %v295
    %1913 = vmatpush.msra.mxu0 %v283
    %1914 = vmatpush.msra.mxu0 %v271
    %1915 = vmatmul.f32.gmra.mxu0 %v61
    %v1916 = vpop.f32.mrf.mxu0
    %v1917 = vadd.f32 %v1894, %v1916
    %1918 = vmatmul.f32.gmra.mxu0 %v65
    %v1919 = vpop.f32.mrf.mxu0
    %v1920 = vadd.f32 %v1897, %v1919
    %1921 = vdwg.mxu0
    %1922 = vmatpush.msra.mxu0 %v643
    %1923 = vmatpush.msra.mxu0 %v631
    %1924 = vmatpush.msra.mxu0 %v619
    %1925 = vmatpush.msra.mxu0 %v607
    %1926 = vmatpush.msra.mxu0 %v595
    %1927 = vmatpush.msra.mxu0 %v583
    %1928 = vmatpush.msra.mxu0 %v571
    %1929 = vmatpush.msra.mxu0 %v559
    %1930 = vmatpush.msra.mxu0 %v547
    %1931 = vmatpush.msra.mxu0 %v535
    %1932 = vmatpush.msra.mxu0 %v523
    %1933 = vmatpush.msra.mxu0 %v511
    %1934 = vmatpush.msra.mxu0 %v499
    %1935 = vmatpush.msra.mxu0 %v487
    %1936 = vmatpush.msra.mxu0 %v475
    %1937 = vmatpush.msra.mxu0 %v463
    %1938 = vmatmul.f32.gmra.mxu0 %v62
    %v1939 = vpop.f32.mrf.mxu0
    %v1940 = vadd.f32 %v1917, %v1939
    %1941 = vmatmul.f32.gmra.mxu0 %v66
    %v1942 = vpop.f32.mrf.mxu0
    %v1943 = vadd.f32 %v1920, %v1942
    %1944 = vdwg.mxu0
    %1945 = vmatpush.msra.mxu0 %v835
    %1946 = vmatpush.msra.mxu0 %v823
    %1947 = vmatpush.msra.mxu0 %v811
    %1948 = vmatpush.msra.mxu0 %v799
    %1949 = vmatpush.msra.mxu0 %v787
    %1950 = vmatpush.msra.mxu0 %v775
    %1951 = vmatpush.msra.mxu0 %v763
    %1952 = vmatpush.msra.mxu0 %v751
    %1953 = vmatpush.msra.mxu0 %v739
    %1954 = vmatpush.msra.mxu0 %v727
    %1955 = vmatpush.msra.mxu0 %v715
    %1956 = vmatpush.msra.mxu0 %v703
    %1957 = vmatpush.msra.mxu0 %v691
    %1958 = vmatpush.msra.mxu0 %v679
    %1959 = vmatpush.msra.mxu0 %v667
    %1960 = vmatpush.msra.mxu0 %v655
    %1961 = vmatmul.f32.gmra.mxu0 %v63
    %v1962 = vpop.f32.mrf.mxu0
    %v1963 = vadd.f32 %v1940, %v1962
    %1964 = vmatmul.f32.gmra.mxu0 %v67
    %v1965 = vpop.f32.mrf.mxu0
    %v1966 = vadd.f32 %v1943, %v1965
    %1967 = vdwg.mxu0
    %1968 = vst [vmem:[#allocation8] sm:$0xff] %v951
    %1969 = vst [vmem:[#allocation8 + $0x8] sm:$0xff] %v1043
    %1970 = vst [vmem:[#allocation8 + $0x10] sm:$0xff] %v1135
    %1971 = vst [vmem:[#allocation8 + $0x18] sm:$0xff] %v1227
    %1972 = vst [vmem:[#allocation8 + $0x20] sm:$0xff] %v1319
    %1973 = vst [vmem:[#allocation8 + $0x28] sm:$0xff] %v1411
    %1974 = vst [vmem:[#allocation8 + $0x30] sm:$0xff] %v1503
    %1975 = vst [vmem:[#allocation8 + $0x38] sm:$0xff] %v1595
    %1976 = vst [vmem:[#allocation8 + $0x40] sm:$0xff] %v1687
    %1977 = vst [vmem:[#allocation8 + $0x48] sm:$0xff] %v1779
    %1978 = vst [vmem:[#allocation8 + $0x50] sm:$0xff] %v1871
    %1979 = vst [vmem:[#allocation8 + $0x58] sm:$0xff] %v1963
    %1980 = vst [vmem:[#allocation8 + $0x60] sm:$0x3] %v954
    %1981 = vst [vmem:[#allocation8 + $0x68] sm:$0x3] %v1046
    %1982 = vst [vmem:[#allocation8 + $0x70] sm:$0x3] %v1138
    %1983 = vst [vmem:[#allocation8 + $0x78] sm:$0x3] %v1230
    %1984 = vst [vmem:[#allocation8 + $0x80] sm:$0x3] %v1322
    %1985 = vst [vmem:[#allocation8 + $0x88] sm:$0x3] %v1414
    %1986 = vst [vmem:[#allocation8 + $0x90] sm:$0x3] %v1506
    %1987 = vst [vmem:[#allocation8 + $0x98] sm:$0x3] %v1598
    %1988 = vst [vmem:[#allocation8 + $0xa0] sm:$0x3] %v1690
    %1989 = vst [vmem:[#allocation8 + $0xa8] sm:$0x3] %v1782
    %1990 = vst [vmem:[#allocation8 + $0xb0] sm:$0x3] %v1874
    %1991 = vst [vmem:[#allocation8 + $0xb8] sm:$0x3] %v1966
    // Predicated region
    $region26: #{tpu_custom_call.1} parent=1 // pred_check
      _
    $region27: #{tpu_custom_call.1} parent=1 // pred_check_branch
      %1993 = sbr.rel (0) target = $region29
    $region28: #{tpu_custom_call.1} parent=1 // pred_region
      %1995 = vsyncadd [#allocation4], 0
      %s1996 = sshll.u32 [#allocation8], 4
      %s1997 = int_to_ptr.vmem [resolvable:$true] %s1996
      %s1998 = sshll.u32 %s3, 4
      %s1999 = int_to_ptr.hbm [resolvable:$true] %s1998
      %2004 = dma.vmem_to_hbm [thread:$0]  %s1997, 3072, %s1999, [#allocation4], 1536, 1536, 96
    $region29: #{tpu_custom_call.1} parent=1 // pred_fallthru
      _
    // Predicated region
    $region30: #{tpu_custom_call.1} parent=1 // pred_check
      _
    $region31: #{tpu_custom_call.1} parent=1 // pred_check_branch
      %2006 = sbr.rel (0) target = $region33
    $region32: #{tpu_custom_call.1} parent=1 // pred_region
      %2008 = dma.done [#allocation4], 3072
    $region33: #{tpu_custom_call.1} parent=1 // pred_fallthru
      _
    %2009 = vsyncpa [#allocation3], 1
    %2010 = vsyncpa [#allocation6], 1
    %2011 = vsyncpa [#allocation4], 1

</llo_original>
